<compile_context>
chip_gen: v7x
topology: tpu7x:2x2x1
jax: 0.10.0
libtpu: 0.0.40
codegen_flags: <defaults>
</compile_context>

<pallas_src>
import functools

import jax
import jax.numpy as jnp
from jax.experimental import pallas as pl
from jax.experimental.pallas import tpu as pltpu


def _bilinear_attn_kernel(wq_ref, uh_ref, vp_ref, vv_ref,    # inputs (projected)
                          h_ref, attn_ref, lse_ref,          # outputs
                          m_sc, l_sc, acc_sc):               # VMEM scratch
    kt = pl.program_id(2)
    nkt = pl.num_programs(2)

    @pl.when(kt == 0)
    def _init():
        m_sc[...] = jnp.full_like(m_sc, -jnp.inf)
        l_sc[...] = jnp.zeros_like(l_sc)
        acc_sc[...] = jnp.zeros_like(acc_sc)

    wq = wq_ref[...]                      # [Qt, H]   (score dtype)
    uh = uh_ref[...]                      # [H,  Kt]  (score dtype), K on lanes
    vv = vv_ref[...]                      # [1,  H]   f32
    Qt, H = wq.shape
    Kt = uh.shape[1]

    # attn[q, k] = sum_h v[h] * tanh(wq[q, h] + uh[h, k])
    # Statically unrolled over H: each step is one lane-dense [Qt, Kt] tanh (EUP)
    # plus broadcast add / scaled accumulate (VPU).  Only a few vregs are live per
    # step — the [Qt, Kt, H] intermediate is never materialized.
    s = jnp.zeros((Qt, Kt), jnp.float32)
    for h in range(H):                                    # H is small and static
        t = jnp.tanh(wq[:, h:h + 1] + uh[h:h + 1, :])     # [Qt, Kt] in score dtype
        s = s + t * vv[:, h:h + 1]                        # f32 accumulation

    # Per-K-tile attn write: lane-dense (Kt multiple of 128) unmasked vst.
    attn_ref[...] = s.astype(attn_ref.dtype)

    # Flash-style online softmax across K tiles (scratch persists over the k axis).
    m_prev = m_sc[...]
    m_new = jnp.maximum(m_prev, jnp.max(s, axis=-1, keepdims=True))
    alpha = jnp.exp(m_prev - m_new)
    p = jnp.exp(s - m_new)
    l_sc[...] = alpha * l_sc[...] + jnp.sum(p, axis=-1, keepdims=True)
    acc_sc[...] = alpha * acc_sc[...] + jnp.dot(
        p.astype(vp_ref.dtype), vp_ref[...],              # bf16 MXU operands
        preferred_element_type=jnp.float32)               # f32 accumulation
    m_sc[...] = m_new

    @pl.when(kt == nkt - 1)
    def _finalize():
        inv_l = pl.reciprocal(l_sc[...], approx=False)    # exact (feedback #9)
        h_ref[...] = (acc_sc[...] * inv_l).astype(h_ref.dtype)
        lse_ref[...] = m_sc[...] + jnp.log(l_sc[...])

    # TODO(synk): mask / masked_fill path of the PyTorch module not implemented
    # (mask=None forward path only).


def _pick_tile(n, target, step):
    """Largest multiple of `step` dividing `n` that is <= target; `n` itself if
    n <= target or no such divisor exists (fall back to no tiling on that axis)."""
    if n <= target:
        return n
    t = (target // step) * step
    while t >= step:
        if n % t == 0:
            return t
        t -= step
    return n


def _vmem_capacity_bytes():
    try:
        cap = getattr(pltpu.get_tpu_info(), "vmem_capacity_bytes", None)
        if cap:
            return int(cap)
    except Exception:
        pass
    return 64 * 1024 * 1024          # conservative fallback: assume v7x (64 MiB)


def bilinear_attention(query, key, value, Wq, bq, Wk, Wv, vvec, *,
                       score_dtype=jnp.float32,   # bf16 recommended on v6e/v7x
                       pv_dtype=jnp.bfloat16,     # MXU operand dtype for p @ vproj
                       attn_dtype=jnp.float32,
                       q_tile=128, k_tile=256):
    B, Q, Dq = query.shape
    _, K, Dk = key.shape
    H = Wq.shape[1]
    f32 = jnp.float32

    # ---- Hoisted projections: three large, MXU-friendly XLA matmuls.
    wq = (query.reshape(B * Q, Dq) @ Wq + bq).reshape(B, Q, H).astype(score_dtype)
    # uh pre-transposed to [B, H, K] so Kt is the lane axis inside the kernel.
    uh_t = (key.reshape(B * K, Dk) @ Wk).reshape(B, K, H)
    uh_t = uh_t.transpose(0, 2, 1).astype(score_dtype)
    # vproj fed in bf16 (single-pass MXU operand); accumulation stays f32 in-kernel.
    vproj = (value.reshape(B * K, Dk) @ Wv).reshape(B, K, H).astype(pv_dtype)
    vv2d = vvec.reshape(1, H).astype(f32)

    # ---- Tiling: Kt multiple of 128 (lane-dense attn stores), Qt multiple of 8.
    Qt = _pick_tile(Q, q_tile, 8)
    Kt = _pick_tile(K, k_tile, 128)
    # Keep >= 2 parallel grid steps so both v7x TensorCores get work (feedback #7).
    while B * (Q // Qt) < 2 and Qt % 16 == 0 and Qt > 8:
        Qt //= 2
    assert Q % Qt == 0 and K % Kt == 0
    grid = (B, Q // Qt, K // Kt)

    # ---- Chip-aware VMEM budget: double-buffered tiles + scratch + live score block.
    sb = jnp.dtype(score_dtype).itemsize
    pb = jnp.dtype(pv_dtype).itemsize
    ab = jnp.dtype(attn_dtype).itemsize
    need = (2 * sb * (Qt * H + H * Kt)              # wq, uh_t (double-buffered)
            + 2 * pb * Kt * H                       # vproj
            + 2 * 4 * H                             # v vector
            + 2 * (4 * Qt * H + ab * Qt * Kt + 4 * Qt)   # outputs
            + 4 * (Qt * H + 2 * Qt)                 # scratch
            + (4 + sb) * Qt * Kt)                   # live score acc + tanh temp
    cap = min(64 * 1024 * 1024, _vmem_capacity_bytes() // 2)   # 32 MiB on v7x, 64 MiB v5e/v6e
    vmem_limit = int(min(max(2 * need, 16 * 1024 * 1024), cap))

    out_shapes = (
        jax.ShapeDtypeStruct((B, Q, H), f32),          # h
        jax.ShapeDtypeStruct((B, Q, K), attn_dtype),   # attn
        jax.ShapeDtypeStruct((B, Q, 1), f32),          # per-row log-sum-exp (internal)
    )

    grid_spec = pltpu.PrefetchScalarGridSpec(
        num_scalar_prefetch=0,
        grid=grid,
        in_specs=[
            pl.BlockSpec((pl.Squeezed(), Qt, H), lambda b, qi, kt: (b, qi, 0)),   # wq
            pl.BlockSpec((pl.Squeezed(), H, Kt), lambda b, qi, kt: (b, 0, kt)),   # uh_t
            pl.BlockSpec((pl.Squeezed(), Kt, H), lambda b, qi, kt: (b, kt, 0)),   # vproj
            pl.BlockSpec((1, H), lambda b, qi, kt: (0, 0)),                       # v vec
        ],
        out_specs=[
            pl.BlockSpec((pl.Squeezed(), Qt, H), lambda b, qi, kt: (b, qi, 0)),   # h
            pl.BlockSpec((pl.Squeezed(), Qt, Kt), lambda b, qi, kt: (b, qi, kt)), # attn
            pl.BlockSpec((pl.Squeezed(), Qt, 1), lambda b, qi, kt: (b, qi, 0)),   # lse
        ],
        scratch_shapes=[
            pltpu.VMEM((Qt, 1), f32),    # running max
            pltpu.VMEM((Qt, 1), f32),    # running denominator
            pltpu.VMEM((Qt, H), f32),    # running weighted-value accumulator
        ],
    )

    h, attn, lse = pl.pallas_call(
        _bilinear_attn_kernel,
        out_shape=out_shapes,
        grid_spec=grid_spec,
        compiler_params=pltpu.CompilerParams(
            dimension_semantics=("parallel", "parallel", "arbitrary"),
            vmem_limit_bytes=vmem_limit),
    )(wq, uh_t, vproj, vv2d)

    # norm_attn = softmax(attn, -1) recovered exactly as exp(attn - logsumexp):
    # one cheap element-wise XLA pass over [B, Q, K]; heavy work stays in-kernel.
    norm = jnp.exp(attn.astype(f32) - lse)
    return h, attn, norm


def reference(query, key, value, Wq, bq, Wk, Wv, vvec):
    # Pure-JAX reference mirroring the PyTorch forward (mask=None).
    wq = query @ Wq + bq                                       # [B, Q, H]
    uh = key @ Wk                                              # [B, K, H]
    wquh = jnp.tanh(wq[:, :, None, :] + uh[:, None, :, :])     # [B, Q, K, H]
    attn = jnp.einsum('bqkh,h->bqk', wquh, vvec)
    norm = jax.nn.softmax(attn, axis=-1)
    vproj = value @ Wv                                         # [B, K, H]
    h = jnp.einsum('bqk,bkh->bqh', norm, vproj)
    return h, attn, norm


if __name__ == "__main__":
    B, Q, K = 2, 16, 256
    query_size, key_size, hidden_size = 16, 16, 32

    root = jax.random.PRNGKey(0)
    kq, kk, kv, kwq, kbq, kwk, kwv, kvv = jax.random.split(root, 8)

    query = jax.random.normal(kq, (B, Q, query_size), dtype=jnp.float32)
    key = jax.random.normal(kk, (B, K, key_size), dtype=jnp.float32)
    value = jax.random.normal(kv, (B, K, key_size), dtype=jnp.float32)

    # Deterministic parameters (shapes of the nn.Linear layers), stored as
    # [in_features, out_features]; v is the [hidden] weight of the final Linear.
    Wq = 0.1 * jax.random.normal(kwq, (query_size, hidden_size), dtype=jnp.float32)
    bq = 0.1 * jax.random.normal(kbq, (hidden_size,), dtype=jnp.float32)
    Wk = 0.1 * jax.random.normal(kwk, (key_size, hidden_size), dtype=jnp.float32)
    Wv = 0.1 * jax.random.normal(kwv, (key_size, hidden_size), dtype=jnp.float32)
    vvec = 0.1 * jax.random.normal(kvv, (hidden_size,), dtype=jnp.float32)

    h_ref, attn_ref, norm_ref = reference(query, key, value, Wq, bq, Wk, Wv, vvec)

    # f32 score path (default; safe on v5e, tight numerics).  k_tile=128 so the
    # test exercises >1 K step of the online softmax.
    run_f32 = jax.jit(functools.partial(bilinear_attention, k_tile=128))
    h, attn, norm = run_f32(query, key, value, Wq, bq, Wk, Wv, vvec)
    jax.block_until_ready((h, attn, norm))

    assert h.shape == (B, Q, hidden_size)
    assert attn.shape == (B, Q, K) and norm.shape == (B, Q, K)
    assert jnp.allclose(attn, attn_ref, atol=1e-4, rtol=1e-4)
    assert jnp.allclose(norm, norm_ref, atol=1e-4, rtol=1e-3)
    assert jnp.allclose(h, h_ref, atol=5e-3, rtol=5e-3)   # bf16 PV matmul operands

    # bf16 score path (recommended on v6e/v7x: bf16 EUP tanh, half input DMA).
    run_bf16 = jax.jit(functools.partial(bilinear_attention,
                                         score_dtype=jnp.bfloat16, k_tile=128))
    h16, attn16, norm16 = run_bf16(query, key, value, Wq, bq, Wk, Wv, vvec)
    jax.block_until_ready((h16, attn16, norm16))
    assert jnp.allclose(attn16, attn_ref, atol=2e-2, rtol=2e-2)
    assert jnp.allclose(norm16, norm_ref, atol=2e-3, rtol=2e-2)
    assert jnp.allclose(h16, h_ref, atol=2e-2, rtol=2e-2)

    print("KERNEL_OK")
</pallas_src>

<mosaic_0001>
module attributes {stable_mosaic.version = 11 : i64} {
  func.func @_bilinear_attn_kernel(%arg0: i32, %arg1: i32, %arg2: i32, %arg3: memref<1x16x32xf32, #tpu.memory_space<vmem>>, %arg4: memref<1x32x128xf32, #tpu.memory_space<vmem>>, %arg5: memref<1x128x32xbf16, #tpu.memory_space<vmem>>, %arg6: memref<1x32xf32, #tpu.memory_space<vmem>>, %arg7: memref<1x16x32xf32, #tpu.memory_space<vmem>>, %arg8: memref<1x16x128xf32, #tpu.memory_space<vmem>>, %arg9: memref<1x16x1xf32, #tpu.memory_space<vmem>>, %arg10: memref<16x1xf32, #tpu.memory_space<vmem>>, %arg11: memref<16x1xf32, #tpu.memory_space<vmem>>, %arg12: memref<16x32xf32, #tpu.memory_space<vmem>>) attributes {dimension_semantics = [#tpu.dimension_semantics<parallel>, #tpu.dimension_semantics<parallel>, #tpu.dimension_semantics<arbitrary>], iteration_bounds = array<i64: 2, 1, 2>, scalar_prefetch = 0 : i64, scratch_operands = 3 : i64, tpu.core_type = #tpu.core_type<tc>, window_params = [{transform_indices = @transform_0, window_bounds = array<i64: 1, 16, 32>}, {transform_indices = @transform_1, window_bounds = array<i64: 1, 32, 128>}, {transform_indices = @transform_2, window_bounds = array<i64: 1, 128, 32>}, {pipeline_mode = #tpu.pipeline_mode<synchronous>, transform_indices = @transform_3, window_bounds = array<i64: 1, 32>}, {transform_indices = @transform_4, window_bounds = array<i64: 1, 16, 32>}, {transform_indices = @transform_5, window_bounds = array<i64: 1, 16, 128>}, {transform_indices = @transform_6, window_bounds = array<i64: 1, 16, 1>}]} {
    %c0_i32 = arith.constant 0 : i32
    %0 = arith.cmpi eq, %arg2, %c0_i32 : i32
    %1 = arith.extui %0 : i1 to i32
    %c0_i32_0 = arith.constant 0 : i32
    %2 = arith.cmpi ne, %1, %c0_i32_0 : i32
    scf.if %2 {
      %cst_30 = arith.constant 0xFF800000 : f32
      %360 = vector.broadcast %cst_30 : f32 to vector<16x1xf32>
      %c0_31 = arith.constant 0 : index
      %c0_32 = arith.constant 0 : index
      %361 = vector.load %arg10[%c0_31, %c0_32] : memref<16x1xf32, #tpu.memory_space<vmem>>, vector<16x1xf32>
      tpu.vector_store %arg10[%c0_31, %c0_32], %360 {strides = array<i32>} : memref<16x1xf32, #tpu.memory_space<vmem>>, vector<16x1xf32>,
      %cst_33 = arith.constant 0.000000e+00 : f32
      %362 = vector.broadcast %cst_33 : f32 to vector<16x1xf32>
      %c0_34 = arith.constant 0 : index
      %c0_35 = arith.constant 0 : index
      %363 = vector.load %arg11[%c0_34, %c0_35] : memref<16x1xf32, #tpu.memory_space<vmem>>, vector<16x1xf32>
      tpu.vector_store %arg11[%c0_34, %c0_35], %362 {strides = array<i32>} : memref<16x1xf32, #tpu.memory_space<vmem>>, vector<16x1xf32>,
      %cst_36 = arith.constant 0.000000e+00 : f32
      %364 = vector.broadcast %cst_36 : f32 to vector<16x32xf32>
      %c0_37 = arith.constant 0 : index
      %c0_38 = arith.constant 0 : index
      %365 = vector.load %arg12[%c0_37, %c0_38] : memref<16x32xf32, #tpu.memory_space<vmem>>, vector<16x32xf32>
      tpu.vector_store %arg12[%c0_37, %c0_38], %364 {strides = array<i32>} : memref<16x32xf32, #tpu.memory_space<vmem>>, vector<16x32xf32>,
    } else {
    }
    %c0 = arith.constant 0 : index
    %c0_1 = arith.constant 0 : index
    %c0_2 = arith.constant 0 : index
    %3 = vector.load %arg3[%c0, %c0_1, %c0_2] : memref<1x16x32xf32, #tpu.memory_space<vmem>>, vector<1x16x32xf32>
    %4 = vector.shape_cast %3 : vector<1x16x32xf32> to vector<16x32xf32>
    %c0_3 = arith.constant 0 : index
    %c0_4 = arith.constant 0 : index
    %c0_5 = arith.constant 0 : index
    %5 = vector.load %arg4[%c0_3, %c0_4, %c0_5] : memref<1x32x128xf32, #tpu.memory_space<vmem>>, vector<1x32x128xf32>
    %6 = vector.shape_cast %5 : vector<1x32x128xf32> to vector<32x128xf32>
    %c0_6 = arith.constant 0 : index
    %c0_7 = arith.constant 0 : index
    %7 = vector.load %arg6[%c0_6, %c0_7] : memref<1x32xf32, #tpu.memory_space<vmem>>, vector<1x32xf32>
    %cst = arith.constant 0.000000e+00 : f32
    %8 = vector.broadcast %cst : f32 to vector<16x128xf32>
    %9 = vector.extract_strided_slice %4 {offsets = [0, 0], sizes = [16, 1], strides = [1, 1]} : vector<16x32xf32> to vector<16x1xf32>
    %10 = vector.extract_strided_slice %6 {offsets = [0, 0], sizes = [1, 128], strides = [1, 1]} : vector<32x128xf32> to vector<1x128xf32>
    %11 = vector.broadcast %9 : vector<16x1xf32> to vector<16x128xf32>
    %12 = vector.broadcast %10 : vector<1x128xf32> to vector<16x128xf32>
    %13 = arith.addf %11, %12 : vector<16x128xf32>
    %14 = math.tanh %13 : vector<16x128xf32>
    %15 = vector.extract_strided_slice %7 {offsets = [0, 0], sizes = [1, 1], strides = [1, 1]} : vector<1x32xf32> to vector<1x1xf32>
    %16 = vector.broadcast %15 : vector<1x1xf32> to vector<16x128xf32>
    %17 = arith.mulf %14, %16 : vector<16x128xf32>
    %18 = arith.addf %8, %17 : vector<16x128xf32>
    %19 = vector.extract_strided_slice %4 {offsets = [0, 1], sizes = [16, 1], strides = [1, 1]} : vector<16x32xf32> to vector<16x1xf32>
    %20 = vector.extract_strided_slice %6 {offsets = [1, 0], sizes = [1, 128], strides = [1, 1]} : vector<32x128xf32> to vector<1x128xf32>
    %21 = vector.broadcast %19 : vector<16x1xf32> to vector<16x128xf32>
    %22 = vector.broadcast %20 : vector<1x128xf32> to vector<16x128xf32>
    %23 = arith.addf %21, %22 : vector<16x128xf32>
    %24 = math.tanh %23 : vector<16x128xf32>
    %25 = vector.extract_strided_slice %7 {offsets = [0, 1], sizes = [1, 1], strides = [1, 1]} : vector<1x32xf32> to vector<1x1xf32>
    %26 = vector.broadcast %25 : vector<1x1xf32> to vector<16x128xf32>
    %27 = arith.mulf %24, %26 : vector<16x128xf32>
    %28 = arith.addf %18, %27 : vector<16x128xf32>
    %29 = vector.extract_strided_slice %4 {offsets = [0, 2], sizes = [16, 1], strides = [1, 1]} : vector<16x32xf32> to vector<16x1xf32>
    %30 = vector.extract_strided_slice %6 {offsets = [2, 0], sizes = [1, 128], strides = [1, 1]} : vector<32x128xf32> to vector<1x128xf32>
    %31 = vector.broadcast %29 : vector<16x1xf32> to vector<16x128xf32>
    %32 = vector.broadcast %30 : vector<1x128xf32> to vector<16x128xf32>
    %33 = arith.addf %31, %32 : vector<16x128xf32>
    %34 = math.tanh %33 : vector<16x128xf32>
    %35 = vector.extract_strided_slice %7 {offsets = [0, 2], sizes = [1, 1], strides = [1, 1]} : vector<1x32xf32> to vector<1x1xf32>
    %36 = vector.broadcast %35 : vector<1x1xf32> to vector<16x128xf32>
    %37 = arith.mulf %34, %36 : vector<16x128xf32>
    %38 = arith.addf %28, %37 : vector<16x128xf32>
    %39 = vector.extract_strided_slice %4 {offsets = [0, 3], sizes = [16, 1], strides = [1, 1]} : vector<16x32xf32> to vector<16x1xf32>
    %40 = vector.extract_strided_slice %6 {offsets = [3, 0], sizes = [1, 128], strides = [1, 1]} : vector<32x128xf32> to vector<1x128xf32>
    %41 = vector.broadcast %39 : vector<16x1xf32> to vector<16x128xf32>
    %42 = vector.broadcast %40 : vector<1x128xf32> to vector<16x128xf32>
    %43 = arith.addf %41, %42 : vector<16x128xf32>
    %44 = math.tanh %43 : vector<16x128xf32>
    %45 = vector.extract_strided_slice %7 {offsets = [0, 3], sizes = [1, 1], strides = [1, 1]} : vector<1x32xf32> to vector<1x1xf32>
    %46 = vector.broadcast %45 : vector<1x1xf32> to vector<16x128xf32>
    %47 = arith.mulf %44, %46 : vector<16x128xf32>
    %48 = arith.addf %38, %47 : vector<16x128xf32>
    %49 = vector.extract_strided_slice %4 {offsets = [0, 4], sizes = [16, 1], strides = [1, 1]} : vector<16x32xf32> to vector<16x1xf32>
    %50 = vector.extract_strided_slice %6 {offsets = [4, 0], sizes = [1, 128], strides = [1, 1]} : vector<32x128xf32> to vector<1x128xf32>
    %51 = vector.broadcast %49 : vector<16x1xf32> to vector<16x128xf32>
    %52 = vector.broadcast %50 : vector<1x128xf32> to vector<16x128xf32>
    %53 = arith.addf %51, %52 : vector<16x128xf32>
    %54 = math.tanh %53 : vector<16x128xf32>
    %55 = vector.extract_strided_slice %7 {offsets = [0, 4], sizes = [1, 1], strides = [1, 1]} : vector<1x32xf32> to vector<1x1xf32>
    %56 = vector.broadcast %55 : vector<1x1xf32> to vector<16x128xf32>
    %57 = arith.mulf %54, %56 : vector<16x128xf32>
    %58 = arith.addf %48, %57 : vector<16x128xf32>
    %59 = vector.extract_strided_slice %4 {offsets = [0, 5], sizes = [16, 1], strides = [1, 1]} : vector<16x32xf32> to vector<16x1xf32>
    %60 = vector.extract_strided_slice %6 {offsets = [5, 0], sizes = [1, 128], strides = [1, 1]} : vector<32x128xf32> to vector<1x128xf32>
    %61 = vector.broadcast %59 : vector<16x1xf32> to vector<16x128xf32>
    %62 = vector.broadcast %60 : vector<1x128xf32> to vector<16x128xf32>
    %63 = arith.addf %61, %62 : vector<16x128xf32>
    %64 = math.tanh %63 : vector<16x128xf32>
    %65 = vector.extract_strided_slice %7 {offsets = [0, 5], sizes = [1, 1], strides = [1, 1]} : vector<1x32xf32> to vector<1x1xf32>
    %66 = vector.broadcast %65 : vector<1x1xf32> to vector<16x128xf32>
    %67 = arith.mulf %64, %66 : vector<16x128xf32>
    %68 = arith.addf %58, %67 : vector<16x128xf32>
    %69 = vector.extract_strided_slice %4 {offsets = [0, 6], sizes = [16, 1], strides = [1, 1]} : vector<16x32xf32> to vector<16x1xf32>
    %70 = vector.extract_strided_slice %6 {offsets = [6, 0], sizes = [1, 128], strides = [1, 1]} : vector<32x128xf32> to vector<1x128xf32>
    %71 = vector.broadcast %69 : vector<16x1xf32> to vector<16x128xf32>
    %72 = vector.broadcast %70 : vector<1x128xf32> to vector<16x128xf32>
    %73 = arith.addf %71, %72 : vector<16x128xf32>
    %74 = math.tanh %73 : vector<16x128xf32>
    %75 = vector.extract_strided_slice %7 {offsets = [0, 6], sizes = [1, 1], strides = [1, 1]} : vector<1x32xf32> to vector<1x1xf32>
    %76 = vector.broadcast %75 : vector<1x1xf32> to vector<16x128xf32>
    %77 = arith.mulf %74, %76 : vector<16x128xf32>
    %78 = arith.addf %68, %77 : vector<16x128xf32>
    %79 = vector.extract_strided_slice %4 {offsets = [0, 7], sizes = [16, 1], strides = [1, 1]} : vector<16x32xf32> to vector<16x1xf32>
    %80 = vector.extract_strided_slice %6 {offsets = [7, 0], sizes = [1, 128], strides = [1, 1]} : vector<32x128xf32> to vector<1x128xf32>
    %81 = vector.broadcast %79 : vector<16x1xf32> to vector<16x128xf32>
    %82 = vector.broadcast %80 : vector<1x128xf32> to vector<16x128xf32>
    %83 = arith.addf %81, %82 : vector<16x128xf32>
    %84 = math.tanh %83 : vector<16x128xf32>
    %85 = vector.extract_strided_slice %7 {offsets = [0, 7], sizes = [1, 1], strides = [1, 1]} : vector<1x32xf32> to vector<1x1xf32>
    %86 = vector.broadcast %85 : vector<1x1xf32> to vector<16x128xf32>
    %87 = arith.mulf %84, %86 : vector<16x128xf32>
    %88 = arith.addf %78, %87 : vector<16x128xf32>
    %89 = vector.extract_strided_slice %4 {offsets = [0, 8], sizes = [16, 1], strides = [1, 1]} : vector<16x32xf32> to vector<16x1xf32>
    %90 = vector.extract_strided_slice %6 {offsets = [8, 0], sizes = [1, 128], strides = [1, 1]} : vector<32x128xf32> to vector<1x128xf32>
    %91 = vector.broadcast %89 : vector<16x1xf32> to vector<16x128xf32>
    %92 = vector.broadcast %90 : vector<1x128xf32> to vector<16x128xf32>
    %93 = arith.addf %91, %92 : vector<16x128xf32>
    %94 = math.tanh %93 : vector<16x128xf32>
    %95 = vector.extract_strided_slice %7 {offsets = [0, 8], sizes = [1, 1], strides = [1, 1]} : vector<1x32xf32> to vector<1x1xf32>
    %96 = vector.broadcast %95 : vector<1x1xf32> to vector<16x128xf32>
    %97 = arith.mulf %94, %96 : vector<16x128xf32>
    %98 = arith.addf %88, %97 : vector<16x128xf32>
    %99 = vector.extract_strided_slice %4 {offsets = [0, 9], sizes = [16, 1], strides = [1, 1]} : vector<16x32xf32> to vector<16x1xf32>
    %100 = vector.extract_strided_slice %6 {offsets = [9, 0], sizes = [1, 128], strides = [1, 1]} : vector<32x128xf32> to vector<1x128xf32>
    %101 = vector.broadcast %99 : vector<16x1xf32> to vector<16x128xf32>
    %102 = vector.broadcast %100 : vector<1x128xf32> to vector<16x128xf32>
    %103 = arith.addf %101, %102 : vector<16x128xf32>
    %104 = math.tanh %103 : vector<16x128xf32>
    %105 = vector.extract_strided_slice %7 {offsets = [0, 9], sizes = [1, 1], strides = [1, 1]} : vector<1x32xf32> to vector<1x1xf32>
    %106 = vector.broadcast %105 : vector<1x1xf32> to vector<16x128xf32>
    %107 = arith.mulf %104, %106 : vector<16x128xf32>
    %108 = arith.addf %98, %107 : vector<16x128xf32>
    %109 = vector.extract_strided_slice %4 {offsets = [0, 10], sizes = [16, 1], strides = [1, 1]} : vector<16x32xf32> to vector<16x1xf32>
    %110 = vector.extract_strided_slice %6 {offsets = [10, 0], sizes = [1, 128], strides = [1, 1]} : vector<32x128xf32> to vector<1x128xf32>
    %111 = vector.broadcast %109 : vector<16x1xf32> to vector<16x128xf32>
    %112 = vector.broadcast %110 : vector<1x128xf32> to vector<16x128xf32>
    %113 = arith.addf %111, %112 : vector<16x128xf32>
    %114 = math.tanh %113 : vector<16x128xf32>
    %115 = vector.extract_strided_slice %7 {offsets = [0, 10], sizes = [1, 1], strides = [1, 1]} : vector<1x32xf32> to vector<1x1xf32>
    %116 = vector.broadcast %115 : vector<1x1xf32> to vector<16x128xf32>
    %117 = arith.mulf %114, %116 : vector<16x128xf32>
    %118 = arith.addf %108, %117 : vector<16x128xf32>
    %119 = vector.extract_strided_slice %4 {offsets = [0, 11], sizes = [16, 1], strides = [1, 1]} : vector<16x32xf32> to vector<16x1xf32>
    %120 = vector.extract_strided_slice %6 {offsets = [11, 0], sizes = [1, 128], strides = [1, 1]} : vector<32x128xf32> to vector<1x128xf32>
    %121 = vector.broadcast %119 : vector<16x1xf32> to vector<16x128xf32>
    %122 = vector.broadcast %120 : vector<1x128xf32> to vector<16x128xf32>
    %123 = arith.addf %121, %122 : vector<16x128xf32>
    %124 = math.tanh %123 : vector<16x128xf32>
    %125 = vector.extract_strided_slice %7 {offsets = [0, 11], sizes = [1, 1], strides = [1, 1]} : vector<1x32xf32> to vector<1x1xf32>
    %126 = vector.broadcast %125 : vector<1x1xf32> to vector<16x128xf32>
    %127 = arith.mulf %124, %126 : vector<16x128xf32>
    %128 = arith.addf %118, %127 : vector<16x128xf32>
    %129 = vector.extract_strided_slice %4 {offsets = [0, 12], sizes = [16, 1], strides = [1, 1]} : vector<16x32xf32> to vector<16x1xf32>
    %130 = vector.extract_strided_slice %6 {offsets = [12, 0], sizes = [1, 128], strides = [1, 1]} : vector<32x128xf32> to vector<1x128xf32>
    %131 = vector.broadcast %129 : vector<16x1xf32> to vector<16x128xf32>
    %132 = vector.broadcast %130 : vector<1x128xf32> to vector<16x128xf32>
    %133 = arith.addf %131, %132 : vector<16x128xf32>
    %134 = math.tanh %133 : vector<16x128xf32>
    %135 = vector.extract_strided_slice %7 {offsets = [0, 12], sizes = [1, 1], strides = [1, 1]} : vector<1x32xf32> to vector<1x1xf32>
    %136 = vector.broadcast %135 : vector<1x1xf32> to vector<16x128xf32>
    %137 = arith.mulf %134, %136 : vector<16x128xf32>
    %138 = arith.addf %128, %137 : vector<16x128xf32>
    %139 = vector.extract_strided_slice %4 {offsets = [0, 13], sizes = [16, 1], strides = [1, 1]} : vector<16x32xf32> to vector<16x1xf32>
    %140 = vector.extract_strided_slice %6 {offsets = [13, 0], sizes = [1, 128], strides = [1, 1]} : vector<32x128xf32> to vector<1x128xf32>
    %141 = vector.broadcast %139 : vector<16x1xf32> to vector<16x128xf32>
    %142 = vector.broadcast %140 : vector<1x128xf32> to vector<16x128xf32>
    %143 = arith.addf %141, %142 : vector<16x128xf32>
    %144 = math.tanh %143 : vector<16x128xf32>
    %145 = vector.extract_strided_slice %7 {offsets = [0, 13], sizes = [1, 1], strides = [1, 1]} : vector<1x32xf32> to vector<1x1xf32>
    %146 = vector.broadcast %145 : vector<1x1xf32> to vector<16x128xf32>
    %147 = arith.mulf %144, %146 : vector<16x128xf32>
    %148 = arith.addf %138, %147 : vector<16x128xf32>
    %149 = vector.extract_strided_slice %4 {offsets = [0, 14], sizes = [16, 1], strides = [1, 1]} : vector<16x32xf32> to vector<16x1xf32>
    %150 = vector.extract_strided_slice %6 {offsets = [14, 0], sizes = [1, 128], strides = [1, 1]} : vector<32x128xf32> to vector<1x128xf32>
    %151 = vector.broadcast %149 : vector<16x1xf32> to vector<16x128xf32>
    %152 = vector.broadcast %150 : vector<1x128xf32> to vector<16x128xf32>
    %153 = arith.addf %151, %152 : vector<16x128xf32>
    %154 = math.tanh %153 : vector<16x128xf32>
    %155 = vector.extract_strided_slice %7 {offsets = [0, 14], sizes = [1, 1], strides = [1, 1]} : vector<1x32xf32> to vector<1x1xf32>
    %156 = vector.broadcast %155 : vector<1x1xf32> to vector<16x128xf32>
    %157 = arith.mulf %154, %156 : vector<16x128xf32>
    %158 = arith.addf %148, %157 : vector<16x128xf32>
    %159 = vector.extract_strided_slice %4 {offsets = [0, 15], sizes = [16, 1], strides = [1, 1]} : vector<16x32xf32> to vector<16x1xf32>
    %160 = vector.extract_strided_slice %6 {offsets = [15, 0], sizes = [1, 128], strides = [1, 1]} : vector<32x128xf32> to vector<1x128xf32>
    %161 = vector.broadcast %159 : vector<16x1xf32> to vector<16x128xf32>
    %162 = vector.broadcast %160 : vector<1x128xf32> to vector<16x128xf32>
    %163 = arith.addf %161, %162 : vector<16x128xf32>
    %164 = math.tanh %163 : vector<16x128xf32>
    %165 = vector.extract_strided_slice %7 {offsets = [0, 15], sizes = [1, 1], strides = [1, 1]} : vector<1x32xf32> to vector<1x1xf32>
    %166 = vector.broadcast %165 : vector<1x1xf32> to vector<16x128xf32>
    %167 = arith.mulf %164, %166 : vector<16x128xf32>
    %168 = arith.addf %158, %167 : vector<16x128xf32>
    %169 = vector.extract_strided_slice %4 {offsets = [0, 16], sizes = [16, 1], strides = [1, 1]} : vector<16x32xf32> to vector<16x1xf32>
    %170 = vector.extract_strided_slice %6 {offsets = [16, 0], sizes = [1, 128], strides = [1, 1]} : vector<32x128xf32> to vector<1x128xf32>
    %171 = vector.broadcast %169 : vector<16x1xf32> to vector<16x128xf32>
    %172 = vector.broadcast %170 : vector<1x128xf32> to vector<16x128xf32>
    %173 = arith.addf %171, %172 : vector<16x128xf32>
    %174 = math.tanh %173 : vector<16x128xf32>
    %175 = vector.extract_strided_slice %7 {offsets = [0, 16], sizes = [1, 1], strides = [1, 1]} : vector<1x32xf32> to vector<1x1xf32>
    %176 = vector.broadcast %175 : vector<1x1xf32> to vector<16x128xf32>
    %177 = arith.mulf %174, %176 : vector<16x128xf32>
    %178 = arith.addf %168, %177 : vector<16x128xf32>
    %179 = vector.extract_strided_slice %4 {offsets = [0, 17], sizes = [16, 1], strides = [1, 1]} : vector<16x32xf32> to vector<16x1xf32>
    %180 = vector.extract_strided_slice %6 {offsets = [17, 0], sizes = [1, 128], strides = [1, 1]} : vector<32x128xf32> to vector<1x128xf32>
    %181 = vector.broadcast %179 : vector<16x1xf32> to vector<16x128xf32>
    %182 = vector.broadcast %180 : vector<1x128xf32> to vector<16x128xf32>
    %183 = arith.addf %181, %182 : vector<16x128xf32>
    %184 = math.tanh %183 : vector<16x128xf32>
    %185 = vector.extract_strided_slice %7 {offsets = [0, 17], sizes = [1, 1], strides = [1, 1]} : vector<1x32xf32> to vector<1x1xf32>
    %186 = vector.broadcast %185 : vector<1x1xf32> to vector<16x128xf32>
    %187 = arith.mulf %184, %186 : vector<16x128xf32>
    %188 = arith.addf %178, %187 : vector<16x128xf32>
    %189 = vector.extract_strided_slice %4 {offsets = [0, 18], sizes = [16, 1], strides = [1, 1]} : vector<16x32xf32> to vector<16x1xf32>
    %190 = vector.extract_strided_slice %6 {offsets = [18, 0], sizes = [1, 128], strides = [1, 1]} : vector<32x128xf32> to vector<1x128xf32>
    %191 = vector.broadcast %189 : vector<16x1xf32> to vector<16x128xf32>
    %192 = vector.broadcast %190 : vector<1x128xf32> to vector<16x128xf32>
    %193 = arith.addf %191, %192 : vector<16x128xf32>
    %194 = math.tanh %193 : vector<16x128xf32>
    %195 = vector.extract_strided_slice %7 {offsets = [0, 18], sizes = [1, 1], strides = [1, 1]} : vector<1x32xf32> to vector<1x1xf32>
    %196 = vector.broadcast %195 : vector<1x1xf32> to vector<16x128xf32>
    %197 = arith.mulf %194, %196 : vector<16x128xf32>
    %198 = arith.addf %188, %197 : vector<16x128xf32>
    %199 = vector.extract_strided_slice %4 {offsets = [0, 19], sizes = [16, 1], strides = [1, 1]} : vector<16x32xf32> to vector<16x1xf32>
    %200 = vector.extract_strided_slice %6 {offsets = [19, 0], sizes = [1, 128], strides = [1, 1]} : vector<32x128xf32> to vector<1x128xf32>
    %201 = vector.broadcast %199 : vector<16x1xf32> to vector<16x128xf32>
    %202 = vector.broadcast %200 : vector<1x128xf32> to vector<16x128xf32>
    %203 = arith.addf %201, %202 : vector<16x128xf32>
    %204 = math.tanh %203 : vector<16x128xf32>
    %205 = vector.extract_strided_slice %7 {offsets = [0, 19], sizes = [1, 1], strides = [1, 1]} : vector<1x32xf32> to vector<1x1xf32>
    %206 = vector.broadcast %205 : vector<1x1xf32> to vector<16x128xf32>
    %207 = arith.mulf %204, %206 : vector<16x128xf32>
    %208 = arith.addf %198, %207 : vector<16x128xf32>
    %209 = vector.extract_strided_slice %4 {offsets = [0, 20], sizes = [16, 1], strides = [1, 1]} : vector<16x32xf32> to vector<16x1xf32>
    %210 = vector.extract_strided_slice %6 {offsets = [20, 0], sizes = [1, 128], strides = [1, 1]} : vector<32x128xf32> to vector<1x128xf32>
    %211 = vector.broadcast %209 : vector<16x1xf32> to vector<16x128xf32>
    %212 = vector.broadcast %210 : vector<1x128xf32> to vector<16x128xf32>
    %213 = arith.addf %211, %212 : vector<16x128xf32>
    %214 = math.tanh %213 : vector<16x128xf32>
    %215 = vector.extract_strided_slice %7 {offsets = [0, 20], sizes = [1, 1], strides = [1, 1]} : vector<1x32xf32> to vector<1x1xf32>
    %216 = vector.broadcast %215 : vector<1x1xf32> to vector<16x128xf32>
    %217 = arith.mulf %214, %216 : vector<16x128xf32>
    %218 = arith.addf %208, %217 : vector<16x128xf32>
    %219 = vector.extract_strided_slice %4 {offsets = [0, 21], sizes = [16, 1], strides = [1, 1]} : vector<16x32xf32> to vector<16x1xf32>
    %220 = vector.extract_strided_slice %6 {offsets = [21, 0], sizes = [1, 128], strides = [1, 1]} : vector<32x128xf32> to vector<1x128xf32>
    %221 = vector.broadcast %219 : vector<16x1xf32> to vector<16x128xf32>
    %222 = vector.broadcast %220 : vector<1x128xf32> to vector<16x128xf32>
    %223 = arith.addf %221, %222 : vector<16x128xf32>
    %224 = math.tanh %223 : vector<16x128xf32>
    %225 = vector.extract_strided_slice %7 {offsets = [0, 21], sizes = [1, 1], strides = [1, 1]} : vector<1x32xf32> to vector<1x1xf32>
    %226 = vector.broadcast %225 : vector<1x1xf32> to vector<16x128xf32>
    %227 = arith.mulf %224, %226 : vector<16x128xf32>
    %228 = arith.addf %218, %227 : vector<16x128xf32>
    %229 = vector.extract_strided_slice %4 {offsets = [0, 22], sizes = [16, 1], strides = [1, 1]} : vector<16x32xf32> to vector<16x1xf32>
    %230 = vector.extract_strided_slice %6 {offsets = [22, 0], sizes = [1, 128], strides = [1, 1]} : vector<32x128xf32> to vector<1x128xf32>
    %231 = vector.broadcast %229 : vector<16x1xf32> to vector<16x128xf32>
    %232 = vector.broadcast %230 : vector<1x128xf32> to vector<16x128xf32>
    %233 = arith.addf %231, %232 : vector<16x128xf32>
    %234 = math.tanh %233 : vector<16x128xf32>
    %235 = vector.extract_strided_slice %7 {offsets = [0, 22], sizes = [1, 1], strides = [1, 1]} : vector<1x32xf32> to vector<1x1xf32>
    %236 = vector.broadcast %235 : vector<1x1xf32> to vector<16x128xf32>
    %237 = arith.mulf %234, %236 : vector<16x128xf32>
    %238 = arith.addf %228, %237 : vector<16x128xf32>
    %239 = vector.extract_strided_slice %4 {offsets = [0, 23], sizes = [16, 1], strides = [1, 1]} : vector<16x32xf32> to vector<16x1xf32>
    %240 = vector.extract_strided_slice %6 {offsets = [23, 0], sizes = [1, 128], strides = [1, 1]} : vector<32x128xf32> to vector<1x128xf32>
    %241 = vector.broadcast %239 : vector<16x1xf32> to vector<16x128xf32>
    %242 = vector.broadcast %240 : vector<1x128xf32> to vector<16x128xf32>
    %243 = arith.addf %241, %242 : vector<16x128xf32>
    %244 = math.tanh %243 : vector<16x128xf32>
    %245 = vector.extract_strided_slice %7 {offsets = [0, 23], sizes = [1, 1], strides = [1, 1]} : vector<1x32xf32> to vector<1x1xf32>
    %246 = vector.broadcast %245 : vector<1x1xf32> to vector<16x128xf32>
    %247 = arith.mulf %244, %246 : vector<16x128xf32>
    %248 = arith.addf %238, %247 : vector<16x128xf32>
    %249 = vector.extract_strided_slice %4 {offsets = [0, 24], sizes = [16, 1], strides = [1, 1]} : vector<16x32xf32> to vector<16x1xf32>
    %250 = vector.extract_strided_slice %6 {offsets = [24, 0], sizes = [1, 128], strides = [1, 1]} : vector<32x128xf32> to vector<1x128xf32>
    %251 = vector.broadcast %249 : vector<16x1xf32> to vector<16x128xf32>
    %252 = vector.broadcast %250 : vector<1x128xf32> to vector<16x128xf32>
    %253 = arith.addf %251, %252 : vector<16x128xf32>
    %254 = math.tanh %253 : vector<16x128xf32>
    %255 = vector.extract_strided_slice %7 {offsets = [0, 24], sizes = [1, 1], strides = [1, 1]} : vector<1x32xf32> to vector<1x1xf32>
    %256 = vector.broadcast %255 : vector<1x1xf32> to vector<16x128xf32>
    %257 = arith.mulf %254, %256 : vector<16x128xf32>
    %258 = arith.addf %248, %257 : vector<16x128xf32>
    %259 = vector.extract_strided_slice %4 {offsets = [0, 25], sizes = [16, 1], strides = [1, 1]} : vector<16x32xf32> to vector<16x1xf32>
    %260 = vector.extract_strided_slice %6 {offsets = [25, 0], sizes = [1, 128], strides = [1, 1]} : vector<32x128xf32> to vector<1x128xf32>
    %261 = vector.broadcast %259 : vector<16x1xf32> to vector<16x128xf32>
    %262 = vector.broadcast %260 : vector<1x128xf32> to vector<16x128xf32>
    %263 = arith.addf %261, %262 : vector<16x128xf32>
    %264 = math.tanh %263 : vector<16x128xf32>
    %265 = vector.extract_strided_slice %7 {offsets = [0, 25], sizes = [1, 1], strides = [1, 1]} : vector<1x32xf32> to vector<1x1xf32>
    %266 = vector.broadcast %265 : vector<1x1xf32> to vector<16x128xf32>
    %267 = arith.mulf %264, %266 : vector<16x128xf32>
    %268 = arith.addf %258, %267 : vector<16x128xf32>
    %269 = vector.extract_strided_slice %4 {offsets = [0, 26], sizes = [16, 1], strides = [1, 1]} : vector<16x32xf32> to vector<16x1xf32>
    %270 = vector.extract_strided_slice %6 {offsets = [26, 0], sizes = [1, 128], strides = [1, 1]} : vector<32x128xf32> to vector<1x128xf32>
    %271 = vector.broadcast %269 : vector<16x1xf32> to vector<16x128xf32>
    %272 = vector.broadcast %270 : vector<1x128xf32> to vector<16x128xf32>
    %273 = arith.addf %271, %272 : vector<16x128xf32>
    %274 = math.tanh %273 : vector<16x128xf32>
    %275 = vector.extract_strided_slice %7 {offsets = [0, 26], sizes = [1, 1], strides = [1, 1]} : vector<1x32xf32> to vector<1x1xf32>
    %276 = vector.broadcast %275 : vector<1x1xf32> to vector<16x128xf32>
    %277 = arith.mulf %274, %276 : vector<16x128xf32>
    %278 = arith.addf %268, %277 : vector<16x128xf32>
    %279 = vector.extract_strided_slice %4 {offsets = [0, 27], sizes = [16, 1], strides = [1, 1]} : vector<16x32xf32> to vector<16x1xf32>
    %280 = vector.extract_strided_slice %6 {offsets = [27, 0], sizes = [1, 128], strides = [1, 1]} : vector<32x128xf32> to vector<1x128xf32>
    %281 = vector.broadcast %279 : vector<16x1xf32> to vector<16x128xf32>
    %282 = vector.broadcast %280 : vector<1x128xf32> to vector<16x128xf32>
    %283 = arith.addf %281, %282 : vector<16x128xf32>
    %284 = math.tanh %283 : vector<16x128xf32>
    %285 = vector.extract_strided_slice %7 {offsets = [0, 27], sizes = [1, 1], strides = [1, 1]} : vector<1x32xf32> to vector<1x1xf32>
    %286 = vector.broadcast %285 : vector<1x1xf32> to vector<16x128xf32>
    %287 = arith.mulf %284, %286 : vector<16x128xf32>
    %288 = arith.addf %278, %287 : vector<16x128xf32>
    %289 = vector.extract_strided_slice %4 {offsets = [0, 28], sizes = [16, 1], strides = [1, 1]} : vector<16x32xf32> to vector<16x1xf32>
    %290 = vector.extract_strided_slice %6 {offsets = [28, 0], sizes = [1, 128], strides = [1, 1]} : vector<32x128xf32> to vector<1x128xf32>
    %291 = vector.broadcast %289 : vector<16x1xf32> to vector<16x128xf32>
    %292 = vector.broadcast %290 : vector<1x128xf32> to vector<16x128xf32>
    %293 = arith.addf %291, %292 : vector<16x128xf32>
    %294 = math.tanh %293 : vector<16x128xf32>
    %295 = vector.extract_strided_slice %7 {offsets = [0, 28], sizes = [1, 1], strides = [1, 1]} : vector<1x32xf32> to vector<1x1xf32>
    %296 = vector.broadcast %295 : vector<1x1xf32> to vector<16x128xf32>
    %297 = arith.mulf %294, %296 : vector<16x128xf32>
    %298 = arith.addf %288, %297 : vector<16x128xf32>
    %299 = vector.extract_strided_slice %4 {offsets = [0, 29], sizes = [16, 1], strides = [1, 1]} : vector<16x32xf32> to vector<16x1xf32>
    %300 = vector.extract_strided_slice %6 {offsets = [29, 0], sizes = [1, 128], strides = [1, 1]} : vector<32x128xf32> to vector<1x128xf32>
    %301 = vector.broadcast %299 : vector<16x1xf32> to vector<16x128xf32>
    %302 = vector.broadcast %300 : vector<1x128xf32> to vector<16x128xf32>
    %303 = arith.addf %301, %302 : vector<16x128xf32>
    %304 = math.tanh %303 : vector<16x128xf32>
    %305 = vector.extract_strided_slice %7 {offsets = [0, 29], sizes = [1, 1], strides = [1, 1]} : vector<1x32xf32> to vector<1x1xf32>
    %306 = vector.broadcast %305 : vector<1x1xf32> to vector<16x128xf32>
    %307 = arith.mulf %304, %306 : vector<16x128xf32>
    %308 = arith.addf %298, %307 : vector<16x128xf32>
    %309 = vector.extract_strided_slice %4 {offsets = [0, 30], sizes = [16, 1], strides = [1, 1]} : vector<16x32xf32> to vector<16x1xf32>
    %310 = vector.extract_strided_slice %6 {offsets = [30, 0], sizes = [1, 128], strides = [1, 1]} : vector<32x128xf32> to vector<1x128xf32>
    %311 = vector.broadcast %309 : vector<16x1xf32> to vector<16x128xf32>
    %312 = vector.broadcast %310 : vector<1x128xf32> to vector<16x128xf32>
    %313 = arith.addf %311, %312 : vector<16x128xf32>
    %314 = math.tanh %313 : vector<16x128xf32>
    %315 = vector.extract_strided_slice %7 {offsets = [0, 30], sizes = [1, 1], strides = [1, 1]} : vector<1x32xf32> to vector<1x1xf32>
    %316 = vector.broadcast %315 : vector<1x1xf32> to vector<16x128xf32>
    %317 = arith.mulf %314, %316 : vector<16x128xf32>
    %318 = arith.addf %308, %317 : vector<16x128xf32>
    %319 = vector.extract_strided_slice %4 {offsets = [0, 31], sizes = [16, 1], strides = [1, 1]} : vector<16x32xf32> to vector<16x1xf32>
    %320 = vector.extract_strided_slice %6 {offsets = [31, 0], sizes = [1, 128], strides = [1, 1]} : vector<32x128xf32> to vector<1x128xf32>
    %321 = vector.broadcast %319 : vector<16x1xf32> to vector<16x128xf32>
    %322 = vector.broadcast %320 : vector<1x128xf32> to vector<16x128xf32>
    %323 = arith.addf %321, %322 : vector<16x128xf32>
    %324 = math.tanh %323 : vector<16x128xf32>
    %325 = vector.extract_strided_slice %7 {offsets = [0, 31], sizes = [1, 1], strides = [1, 1]} : vector<1x32xf32> to vector<1x1xf32>
    %326 = vector.broadcast %325 : vector<1x1xf32> to vector<16x128xf32>
    %327 = arith.mulf %324, %326 : vector<16x128xf32>
    %328 = arith.addf %318, %327 : vector<16x128xf32>
    %c0_8 = arith.constant 0 : index
    %c0_9 = arith.constant 0 : index
    %c0_10 = arith.constant 0 : index
    %329 = vector.load %arg8[%c0_8, %c0_9, %c0_10] : memref<1x16x128xf32, #tpu.memory_space<vmem>>, vector<1x16x128xf32>
    %330 = vector.shape_cast %329 : vector<1x16x128xf32> to vector<16x128xf32>
    %331 = vector.shape_cast %328 : vector<16x128xf32> to vector<1x16x128xf32>
    tpu.vector_store %arg8[%c0_8, %c0_9, %c0_10], %331 {strides = array<i32>} : memref<1x16x128xf32, #tpu.memory_space<vmem>>, vector<1x16x128xf32>,
    %c0_11 = arith.constant 0 : index
    %c0_12 = arith.constant 0 : index
    %332 = vector.load %arg10[%c0_11, %c0_12] : memref<16x1xf32, #tpu.memory_space<vmem>>, vector<16x1xf32>
    %cst_13 = arith.constant dense<0xFF800000> : vector<16xf32>
    %333 = vector.multi_reduction <maximumf>, %328, %cst_13 [1] : vector<16x128xf32> to vector<16xf32>
    %334 = vector.shape_cast %333 : vector<16xf32> to vector<16x1xf32>
    %335 = arith.maximumf %332, %334 : vector<16x1xf32>
    %336 = arith.subf %332, %335 : vector<16x1xf32>
    %337 = math.exp %336 : vector<16x1xf32>
    %338 = vector.broadcast %335 : vector<16x1xf32> to vector<16x128xf32>
    %339 = arith.subf %328, %338 : vector<16x128xf32>
    %340 = math.exp %339 : vector<16x128xf32>
    %c0_14 = arith.constant 0 : index
    %c0_15 = arith.constant 0 : index
    %341 = vector.load %arg11[%c0_14, %c0_15] : memref<16x1xf32, #tpu.memory_space<vmem>>, vector<16x1xf32>
    %342 = arith.mulf %337, %341 : vector<16x1xf32>
    %cst_16 = arith.constant dense<0.000000e+00> : vector<16xf32>
    %343 = vector.multi_reduction <add>, %340, %cst_16 [1] : vector<16x128xf32> to vector<16xf32>
    %344 = vector.shape_cast %343 : vector<16xf32> to vector<16x1xf32>
    %345 = arith.addf %342, %344 : vector<16x1xf32>
    %c0_17 = arith.constant 0 : index
    %c0_18 = arith.constant 0 : index
    %346 = vector.load %arg11[%c0_17, %c0_18] : memref<16x1xf32, #tpu.memory_space<vmem>>, vector<16x1xf32>
    tpu.vector_store %arg11[%c0_17, %c0_18], %345 {strides = array<i32>} : memref<16x1xf32, #tpu.memory_space<vmem>>, vector<16x1xf32>,
    %c0_19 = arith.constant 0 : index
    %c0_20 = arith.constant 0 : index
    %347 = vector.load %arg12[%c0_19, %c0_20] : memref<16x32xf32, #tpu.memory_space<vmem>>, vector<16x32xf32>
    %348 = vector.broadcast %337 : vector<16x1xf32> to vector<16x32xf32>
    %349 = arith.mulf %348, %347 : vector<16x32xf32>
    %350 = arith.truncf %340 : vector<16x128xf32> to vector<16x128xbf16>
    %c0_21 = arith.constant 0 : index
    %c0_22 = arith.constant 0 : index
    %c0_23 = arith.constant 0 : index
    %351 = vector.load %arg5[%c0_21, %c0_22, %c0_23] : memref<1x128x32xbf16, #tpu.memory_space<vmem>>, vector<1x128x32xbf16>
    %352 = vector.shape_cast %351 : vector<1x128x32xbf16> to vector<128x32xbf16>
    %cst_24 = arith.constant dense<0.000000e+00> : vector<16x32xf32>
    %353 = tpu.matmul %350, %352, %cst_24 {dimension_numbers = #tpu.dot_dimension_numbers<[1], [0], [0], [1], [0, 0, 1, 1], [], []>} : vector<16x128xbf16>, vector<128x32xbf16>, vector<16x32xf32> -> vector<16x32xf32>
    %354 = arith.addf %349, %353 : vector<16x32xf32>
    %c0_25 = arith.constant 0 : index
    %c0_26 = arith.constant 0 : index
    %355 = vector.load %arg12[%c0_25, %c0_26] : memref<16x32xf32, #tpu.memory_space<vmem>>, vector<16x32xf32>
    tpu.vector_store %arg12[%c0_25, %c0_26], %354 {strides = array<i32>} : memref<16x32xf32, #tpu.memory_space<vmem>>, vector<16x32xf32>,
    %c0_27 = arith.constant 0 : index
    %c0_28 = arith.constant 0 : index
    %356 = vector.load %arg10[%c0_27, %c0_28] : memref<16x1xf32, #tpu.memory_space<vmem>>, vector<16x1xf32>
    tpu.vector_store %arg10[%c0_27, %c0_28], %335 {strides = array<i32>} : memref<16x1xf32, #tpu.memory_space<vmem>>, vector<16x1xf32>,
    %c1_i32 = arith.constant 1 : i32
    %357 = arith.cmpi eq, %arg2, %c1_i32 : i32
    %358 = arith.extui %357 : i1 to i32
    %c0_i32_29 = arith.constant 0 : i32
    %359 = arith.cmpi ne, %358, %c0_i32_29 : i32
    scf.if %359 {
      %c0_30 = arith.constant 0 : index
      %c0_31 = arith.constant 0 : index
      %360 = vector.load %arg11[%c0_30, %c0_31] : memref<16x1xf32, #tpu.memory_space<vmem>>, vector<16x1xf32>
      %361 = tpu.reciprocal %360 : vector<16x1xf32> -> vector<16x1xf32>
      %c0_32 = arith.constant 0 : index
      %c0_33 = arith.constant 0 : index
      %362 = vector.load %arg12[%c0_32, %c0_33] : memref<16x32xf32, #tpu.memory_space<vmem>>, vector<16x32xf32>
      %363 = vector.broadcast %361 : vector<16x1xf32> to vector<16x32xf32>
      %364 = arith.mulf %362, %363 : vector<16x32xf32>
      %c0_34 = arith.constant 0 : index
      %c0_35 = arith.constant 0 : index
      %c0_36 = arith.constant 0 : index
      %365 = vector.load %arg7[%c0_34, %c0_35, %c0_36] : memref<1x16x32xf32, #tpu.memory_space<vmem>>, vector<1x16x32xf32>
      %366 = vector.shape_cast %365 : vector<1x16x32xf32> to vector<16x32xf32>
      %367 = vector.shape_cast %364 : vector<16x32xf32> to vector<1x16x32xf32>
      tpu.vector_store %arg7[%c0_34, %c0_35, %c0_36], %367 {strides = array<i32>} : memref<1x16x32xf32, #tpu.memory_space<vmem>>, vector<1x16x32xf32>,
      %c0_37 = arith.constant 0 : index
      %c0_38 = arith.constant 0 : index
      %368 = vector.load %arg10[%c0_37, %c0_38] : memref<16x1xf32, #tpu.memory_space<vmem>>, vector<16x1xf32>
      %c0_39 = arith.constant 0 : index
      %c0_40 = arith.constant 0 : index
      %369 = vector.load %arg11[%c0_39, %c0_40] : memref<16x1xf32, #tpu.memory_space<vmem>>, vector<16x1xf32>
      %370 = math.log %369 : vector<16x1xf32>
      %371 = arith.addf %368, %370 : vector<16x1xf32>
      %c0_41 = arith.constant 0 : index
      %c0_42 = arith.constant 0 : index
      %c0_43 = arith.constant 0 : index
      %372 = vector.load %arg9[%c0_41, %c0_42, %c0_43] : memref<1x16x1xf32, #tpu.memory_space<vmem>>, vector<1x16x1xf32>
      %373 = vector.shape_cast %372 : vector<1x16x1xf32> to vector<16x1xf32>
      %374 = vector.shape_cast %371 : vector<16x1xf32> to vector<1x16x1xf32>
      tpu.vector_store %arg9[%c0_41, %c0_42, %c0_43], %374 {strides = array<i32>} : memref<1x16x1xf32, #tpu.memory_space<vmem>>, vector<1x16x1xf32>,
    } else {
    }
    return
  }
  func.func @transform_0(%arg0: i32, %arg1: i32, %arg2: i32) -> (i32, i32, i32) {
    %c0_i32 = arith.constant 0 : i32
    %c0_i32_0 = arith.constant 0 : i32
    return %arg0, %arg1, %c0_i32 : i32, i32, i32
  }
  func.func @transform_1(%arg0: i32, %arg1: i32, %arg2: i32) -> (i32, i32, i32) {
    %c0_i32 = arith.constant 0 : i32
    %c0_i32_0 = arith.constant 0 : i32
    return %arg0, %c0_i32, %arg2 : i32, i32, i32
  }
  func.func @transform_2(%arg0: i32, %arg1: i32, %arg2: i32) -> (i32, i32, i32) {
    %c0_i32 = arith.constant 0 : i32
    %c0_i32_0 = arith.constant 0 : i32
    return %arg0, %arg2, %c0_i32 : i32, i32, i32
  }
  func.func @transform_3(%arg0: i32, %arg1: i32, %arg2: i32) -> (i32, i32) {
    %c0_i32 = arith.constant 0 : i32
    %c0_i32_0 = arith.constant 0 : i32
    %c0_i32_1 = arith.constant 0 : i32
    return %c0_i32, %c0_i32_0 : i32, i32
  }
  func.func @transform_4(%arg0: i32, %arg1: i32, %arg2: i32) -> (i32, i32, i32) {
    %c0_i32 = arith.constant 0 : i32
    %c0_i32_0 = arith.constant 0 : i32
    return %arg0, %arg1, %c0_i32 : i32, i32, i32
  }
  func.func @transform_5(%arg0: i32, %arg1: i32, %arg2: i32) -> (i32, i32, i32) {
    %c0_i32 = arith.constant 0 : i32
    return %arg0, %arg1, %arg2 : i32, i32, i32
  }
  func.func @transform_6(%arg0: i32, %arg1: i32, %arg2: i32) -> (i32, i32, i32) {
    %c0_i32 = arith.constant 0 : i32
    %c0_i32_0 = arith.constant 0 : i32
    return %arg0, %arg1, %c0_i32 : i32, i32, i32
  }
}

</mosaic_0001>

<llo_original>
// kernel: bilinear_attention.1
$region0: #{bilinear_attention.1}
  #allocation0 [shape = 'u32[]', space=smem, size = 0x4, offset = 0x4, fixed_abs, tag = 'smem constant byte address 0x4 - core index']
  #allocation1 [shape = 'u32[144,128]{1,0:T(1,128)}', space=vmem, size = 0x12000, scoped, tag = 'internal scratch']
  #allocation2 [shape = 'f32[16,1]{1,0:T(8,128)}', space=vmem, size = 0x2000, scoped, tag = 'scratch operand']
  #allocation3 [shape = 'f32[16,1]{1,0:T(8,128)}', space=vmem, size = 0x2000, scoped, tag = 'scratch operand']
  #allocation4 [shape = 'f32[16,32]{1,0:T(8,128)}', space=vmem, size = 0x2000, scoped, tag = 'scratch operand']
  %s0 = inlined_call_operand.vmem [shape: f32[2,16,32], index: 0, kind: input, shape index: {}]
  %s1 = inlined_call_operand.vmem [shape: f32[2,32,256], index: 1, kind: input, shape index: {}]
  %s2 = inlined_call_operand.vmem [shape: bf16[2,256,32], index: 2, kind: input, shape index: {}]
  %s3 = inlined_call_operand.vmem [shape: f32[1,32], index: 3, kind: input, shape index: {}]
  %s4 = inlined_call_operand.hbm [shape: f32[2,16,32], index: 4, kind: output, shape index: {0}]
  %s5 = inlined_call_operand.vmem [shape: f32[2,16,256], index: 5, kind: output, shape index: {1}]
  %s6 = inlined_call_operand.vmem [shape: f32[2,16,1], index: 6, kind: output, shape index: {2}]
  %7 = xla_tuple %s4, %s5, %s6
  %s8 = sld [smem:[#allocation0]]
  $region145: #{bilinear_attention.1} parent=0
    _
  %s10 = ssub.s32 1, %s8
  %s11 = scalar_select 0, %s10, %s8
  $region1: #{bilinear_attention.1} parent=0
    #allocation5 [shape = 'u8[32768]{0}', space=vmem, size = 0x8000, scoped, tag = 'input window, operand 1']
    #allocation6 [shape = 'u8[16384]{0}', space=vmem, size = 0x4000, scoped, tag = 'output window, operand 0']
    #allocation7 [shape = 's32[2]{0}', space=sflag, size = 0x8, scoped, tag = 'scoped memory for bilinear_attention.1']
    #allocation8 [shape = 'u8[16384]{0}', space=vmem, size = 0x4000, scoped, tag = 'output window, operand 1']
    %12 = vsyncpa [#allocation7], 0
    %s13 = scalar_lea.sflag [#allocation7], 1
    %14 = vsyncpa %s13, 0
    loop: start=0, step=1, limit=6
    $region2: #{bilinear_attention.1} parent=1 // loop_pre_header
      _
    $region3: #{bilinear_attention.1} parent=1 // loop_header
      %s16 = sphi 0, %s20
      %p17 = scmp.ge.s32.totalorder %s16, 6
      %s23 = sphi 0, %s42
      %s24 = sphi 0, %s38
      %s25 = sphi 0, %s34
      %s26 = sphi 0, %s23
      %s27 = sphi 0, %s24
      %s28 = sphi 0, %s25
      %s29 = sphi 0, %s26
      %s30 = sphi 0, %s27
      %s31 = sphi 0, %s28
      %s47 = sphi 0, %s49
      %s50 = sphi 0, %s47
      %s51 = sphi 0, %s50
      %s67 = sphi 0, %s51
      %s75 = sphi 0, %s77
      %s78 = sphi 0, %s75
      %s79 = sphi 0, %s78
      %s95 = sphi 0, %s79
      %s103 = sphi 0, %s105
      %s106 = sphi 0, %s103
      %s107 = sphi 0, %s106
      %s123 = sphi 0, %s107
      %s127 = sphi 0, %s127
      %s129 = sphi 0, %s127
      %s130 = sphi 0, %s129
      %s144 = sphi 0, %s130
      %s152 = sphi 0, %s154
      %s155 = sphi 0, %s152
      %s156 = sphi 0, %s155
      %s172 = sphi 0, %s156
      %s182 = sphi 0, %s184
      %s185 = sphi 0, %s182
      %s186 = sphi 0, %s185
      %s202 = sphi 0, %s186
      %s210 = sphi 0, %s212
      %s213 = sphi 0, %s210
      %s214 = sphi 0, %s213
      %s230 = sphi 0, %s214
    $region4: #{bilinear_attention.1} parent=1 // loop_header_branch
      %19 = sbr.rel (%p17) target = $region8
    $region5: #{bilinear_attention.1} parent=1 // loop_body
      %s21 = ssub.s32 %s16, 1
      %s22 = ssub.s32 %s16, 2
      %s32 = sadd.s32 1, %s25
      %p33 = scmp.ge.s32.totalorder %s32, 2
      %s34 = scalar_select %p33, 0, %s32
      %s35 = sadd.s32 1, %s24
      %s36 = scalar_select %p33, %s35, %s24
      %p37 = scmp.ge.s32.totalorder %s36, 1
      %s38 = scalar_select %p37, 0, %s36
      %s39 = sadd.s32 1, %s23
      %s40 = scalar_select %p37, %s39, %s23
      %p41 = scmp.ge.s32.totalorder %s40, 2
      %s42 = scalar_select %p41, 0, %s40
      %s43 = ssub.s32 %s23, %s42
      %s44 = ssub.s32 %s24, %s38
      %s45 = sor.u32 %s43, %s44
      %p46 = scmp.eq.s32.totalorder %s45, 0
      %s48 = sadd.s32 %s47, 1
      %s49 = scalar_select %p46, %s47, %s48
      %p52 = pneg %p46
      %p53 = scmp.eq.s32.totalorder %s16, 3
      %p54 = por %p52, %p53
      %p55 = scmp.ne.s32.totalorder %s47, %s50
      %p56 = scmp.eq.s32.totalorder %s16, 0
      %p57 = por %p55, %p56
      %p58 = scmp.ne.s32.totalorder %s47, %s50
      %p59 = scmp.eq.s32.totalorder %s21, 3
      %p60 = por %p58, %p59
      %p61 = scmp.ne.s32.totalorder %s50, %s51
      %p62 = scmp.eq.s32.totalorder %s21, 0
      %p63 = por %p61, %p62
      %p64 = scmp.ne.s32.totalorder %s50, %s51
      %p65 = scmp.eq.s32.totalorder %s22, 3
      %p66 = por %p64, %p65
      %p68 = scmp.ne.s32.totalorder %s51, %s67
      %p69 = scmp.eq.s32.totalorder %s22, 0
      %p70 = por %p68, %p69
      %s71 = ssub.s32 %s23, %s42
      %s72 = ssub.s32 %s25, %s34
      %s73 = sor.u32 %s71, %s72
      %p74 = scmp.eq.s32.totalorder %s73, 0
      %s76 = sadd.s32 %s75, 1
      %s77 = scalar_select %p74, %s75, %s76
      %p80 = pneg %p74
      %p81 = scmp.eq.s32.totalorder %s16, 3
      %p82 = por %p80, %p81
      %p83 = scmp.ne.s32.totalorder %s75, %s78
      %p84 = scmp.eq.s32.totalorder %s16, 0
      %p85 = por %p83, %p84
      %p86 = scmp.ne.s32.totalorder %s75, %s78
      %p87 = scmp.eq.s32.totalorder %s21, 3
      %p88 = por %p86, %p87
      %p89 = scmp.ne.s32.totalorder %s78, %s79
      %p90 = scmp.eq.s32.totalorder %s21, 0
      %p91 = por %p89, %p90
      %p92 = scmp.ne.s32.totalorder %s78, %s79
      %p93 = scmp.eq.s32.totalorder %s22, 3
      %p94 = por %p92, %p93
      %p96 = scmp.ne.s32.totalorder %s79, %s95
      %p97 = scmp.eq.s32.totalorder %s22, 0
      %p98 = por %p96, %p97
      %s99 = ssub.s32 %s23, %s42
      %s100 = ssub.s32 %s25, %s34
      %s101 = sor.u32 %s99, %s100
      %p102 = scmp.eq.s32.totalorder %s101, 0
      %s104 = sadd.s32 %s103, 1
      %s105 = scalar_select %p102, %s103, %s104
      %p108 = pneg %p102
      %p109 = scmp.eq.s32.totalorder %s16, 3
      %p110 = por %p108, %p109
      %p111 = scmp.ne.s32.totalorder %s103, %s106
      %p112 = scmp.eq.s32.totalorder %s16, 0
      %p113 = por %p111, %p112
      %p114 = scmp.ne.s32.totalorder %s103, %s106
      %p115 = scmp.eq.s32.totalorder %s21, 3
      %p116 = por %p114, %p115
      %p117 = scmp.ne.s32.totalorder %s106, %s107
      %p118 = scmp.eq.s32.totalorder %s21, 0
      %p119 = por %p117, %p118
      %p120 = scmp.ne.s32.totalorder %s106, %s107
      %p121 = scmp.eq.s32.totalorder %s22, 3
      %p122 = por %p120, %p121
      %p124 = scmp.ne.s32.totalorder %s107, %s123
      %p125 = scmp.eq.s32.totalorder %s22, 0
      %p126 = por %p124, %p125
      %s128 = sadd.s32 %s127, 1
      %p131 = scmp.eq.s32.totalorder %s16, 3
      %p132 = scmp.ne.s32.totalorder %s127, %s129
      %p133 = scmp.eq.s32.totalorder %s16, 0
      %p134 = por %p132, %p133
      %p135 = scmp.ne.s32.totalorder %s127, %s129
      %p136 = scmp.eq.s32.totalorder %s21, 3
      %p137 = por %p135, %p136
      %p138 = scmp.ne.s32.totalorder %s129, %s130
      %p139 = scmp.eq.s32.totalorder %s21, 0
      %p140 = por %p138, %p139
      %p141 = scmp.ne.s32.totalorder %s129, %s130
      %p142 = scmp.eq.s32.totalorder %s22, 3
      %p143 = por %p141, %p142
      %p145 = scmp.ne.s32.totalorder %s130, %s144
      %p146 = scmp.eq.s32.totalorder %s22, 0
      %p147 = por %p145, %p146
      %s148 = ssub.s32 %s23, %s42
      %s149 = ssub.s32 %s24, %s38
      %s150 = sor.u32 %s148, %s149
      %p151 = scmp.eq.s32.totalorder %s150, 0
      %s153 = sadd.s32 %s152, 1
      %s154 = scalar_select %p151, %s152, %s153
      %p157 = pneg %p151
      %p158 = scmp.eq.s32.totalorder %s16, 3
      %p159 = por %p157, %p158
      %p160 = scmp.ne.s32.totalorder %s152, %s155
      %p161 = scmp.eq.s32.totalorder %s16, 0
      %p162 = por %p160, %p161
      %p163 = scmp.ne.s32.totalorder %s152, %s155
      %p164 = scmp.eq.s32.totalorder %s21, 3
      %p165 = por %p163, %p164
      %p166 = scmp.ne.s32.totalorder %s155, %s156
      %p167 = scmp.eq.s32.totalorder %s21, 0
      %p168 = por %p166, %p167
      %p169 = scmp.ne.s32.totalorder %s155, %s156
      %p170 = scmp.eq.s32.totalorder %s22, 3
      %p171 = por %p169, %p170
      %p173 = scmp.ne.s32.totalorder %s156, %s172
      %p174 = scmp.eq.s32.totalorder %s22, 0
      %p175 = por %p173, %p174
      %s176 = ssub.s32 %s23, %s42
      %s177 = ssub.s32 %s24, %s38
      %s178 = sor.u32 %s176, %s177
      %s179 = ssub.s32 %s25, %s34
      %s180 = sor.u32 %s178, %s179
      %p181 = scmp.eq.s32.totalorder %s180, 0
      %s183 = sadd.s32 %s182, 1
      %s184 = scalar_select %p181, %s182, %s183
      %p187 = pneg %p181
      %p188 = scmp.eq.s32.totalorder %s16, 3
      %p189 = por %p187, %p188
      %p190 = scmp.ne.s32.totalorder %s182, %s185
      %p191 = scmp.eq.s32.totalorder %s16, 0
      %p192 = por %p190, %p191
      %p193 = scmp.ne.s32.totalorder %s182, %s185
      %p194 = scmp.eq.s32.totalorder %s21, 3
      %p195 = por %p193, %p194
      %p196 = scmp.ne.s32.totalorder %s185, %s186
      %p197 = scmp.eq.s32.totalorder %s21, 0
      %p198 = por %p196, %p197
      %p199 = scmp.ne.s32.totalorder %s185, %s186
      %p200 = scmp.eq.s32.totalorder %s22, 3
      %p201 = por %p199, %p200
      %p203 = scmp.ne.s32.totalorder %s186, %s202
      %p204 = scmp.eq.s32.totalorder %s22, 0
      %p205 = por %p203, %p204
      %s206 = ssub.s32 %s23, %s42
      %s207 = ssub.s32 %s24, %s38
      %s208 = sor.u32 %s206, %s207
      %p209 = scmp.eq.s32.totalorder %s208, 0
      %s211 = sadd.s32 %s210, 1
      %s212 = scalar_select %p209, %s210, %s211
      %p215 = pneg %p209
      %p216 = scmp.eq.s32.totalorder %s16, 3
      %p217 = por %p215, %p216
      %p218 = scmp.ne.s32.totalorder %s210, %s213
      %p219 = scmp.eq.s32.totalorder %s16, 0
      %p220 = por %p218, %p219
      %p221 = scmp.ne.s32.totalorder %s210, %s213
      %p222 = scmp.eq.s32.totalorder %s21, 3
      %p223 = por %p221, %p222
      %p224 = scmp.ne.s32.totalorder %s213, %s214
      %p225 = scmp.eq.s32.totalorder %s21, 0
      %p226 = por %p224, %p225
      %p227 = scmp.ne.s32.totalorder %s213, %s214
      %p228 = scmp.eq.s32.totalorder %s22, 3
      %p229 = por %p227, %p228
      %p231 = scmp.ne.s32.totalorder %s214, %s230
      %p232 = scmp.eq.s32.totalorder %s22, 0
      %p233 = por %p231, %p232
      %p234 = scmp.le.s32.totalorder 1, %s16
      %p235 = scmp.lt.s32.totalorder %s16, 5
      %p236 = pnand %p234, %p235
      %p237 = pneg %p236
      // Predicated region
      $region9: #{bilinear_attention.1} parent=5 // pred_check
        _
      $region10: #{bilinear_attention.1} parent=5 // pred_check_branch
        %239 = sbr.rel (%p236) target = $region12
      $region11: #{bilinear_attention.1} parent=5 // pred_region
        %s240 = ssub.s32 %s16, 1
        // Predicated region
        $region13: #{bilinear_attention.1} parent=11 // pred_check
          %p241 = pneg %p140
        $region14: #{bilinear_attention.1} parent=11 // pred_check_branch
          %243 = sbr.rel (%p241) target = $region16
        $region15: #{bilinear_attention.1} parent=11 // pred_region
          _
        $region16: #{bilinear_attention.1} parent=11 // pred_fallthru
          _
      $region12: #{bilinear_attention.1} parent=5 // pred_fallthru
        _
      %p244 = scmp.lt.s32.totalorder %s16, 4
      // Predicated region
      $region17: #{bilinear_attention.1} parent=5 // pred_check
        %p245 = pneg %p244
      $region18: #{bilinear_attention.1} parent=5 // pred_check_branch
        %247 = sbr.rel (%p245) target = $region20
      $region19: #{bilinear_attention.1} parent=5 // pred_region
        // Predicated region
        $region21: #{bilinear_attention.1} parent=19 // pred_check
          %p248 = pneg %p57
        $region22: #{bilinear_attention.1} parent=19 // pred_check_branch
          %250 = sbr.rel (%p248) target = $region24
        $region23: #{bilinear_attention.1} parent=19 // pred_region
          %s251 = smul.u32 2, %s24
          %p252 = scmp.lt.s32.totalorder %s23, 1
          %s253 = scalar_select %p252, %s23, 1
          %p254 = scmp.lt.s32.totalorder %s251, 1
          %s255 = scalar_select %p254, %s251, 1
          %s256 = smul.addr %s253, 2
          %s257 = sadd.s32 %s255, %s256
          %s258 = smul.addr %s257, 8
          %s259 = scalar_lea.vmem %s0, %s258
          %s260 = smul.u32 2, %s24
        $region24: #{bilinear_attention.1} parent=19 // pred_fallthru
          _
        // Predicated region
        $region25: #{bilinear_attention.1} parent=19 // pred_check
          %p261 = pneg %p85
        $region26: #{bilinear_attention.1} parent=19 // pred_check_branch
          %263 = sbr.rel (%p261) target = $region28
        $region27: #{bilinear_attention.1} parent=19 // pred_region
          %s264 = sand.u32 %s75, 1
          %s265 = sand.u32 %s75, 1
          %s266 = smul.addr %s265, 32
          %s267 = scalar_lea.vmem [#allocation5], %s266
          %s268 = smul.addr %s23, 8
          %s269 = sadd.s32 %s25, %s268
          %s270 = smul.addr %s269, 8
          %s271 = scalar_lea.vmem %s1, %s270
          // Predicated region
          $region29: #{bilinear_attention.1} parent=27 // pred_check
            _
          $region30: #{bilinear_attention.1} parent=27 // pred_check_branch
            %273 = sbr.rel (0) target = $region32
          $region31: #{bilinear_attention.1} parent=27 // pred_region
            // Predicated region
            $region33: #{bilinear_attention.1} parent=31 // pred_check
              _
            $region34: #{bilinear_attention.1} parent=31 // pred_check_branch
              %275 = sbr.rel (0) target = $region36
            $region35: #{bilinear_attention.1} parent=31 // pred_region
              // Predicated region
              $region48: #{bilinear_attention.1} parent=35 // pred_check
                _
              $region49: #{bilinear_attention.1} parent=35 // pred_check_branch
                %296 = sbr.rel (0) target = $region51
              $region50: #{bilinear_attention.1} parent=35 // pred_region
                loop: start=0, step=1, limit=1
                $region52: #{bilinear_attention.1} parent=50 // loop_pre_header
                  _
                $region53: #{bilinear_attention.1} parent=50 // loop_header
                  %s298 = sphi 0, %s302
                  %p299 = scmp.ge.s32.totalorder %s298, 1
                  %s303 = sphi %s271, %s271
                  %s304 = sphi %s267, %s267
                $region54: #{bilinear_attention.1} parent=50 // loop_header_branch
                  %301 = sbr.rel (%p299) target = $region58
                $region55: #{bilinear_attention.1} parent=50 // loop_body
                  %v305 = vld [vmem:[%s303] sm:$0xff]
                  %306 = vst [vmem:[%s304] sm:$0xff] %v305
                  %v307 = vld [vmem:[%s303 + $0x10] sm:$0xff]
                  %308 = vst [vmem:[%s304 + $0x8] sm:$0xff] %v307
                  %v309 = vld [vmem:[%s303 + $0x20] sm:$0xff]
                  %310 = vst [vmem:[%s304 + $0x10] sm:$0xff] %v309
                  %v311 = vld [vmem:[%s303 + $0x30] sm:$0xff]
                  %312 = vst [vmem:[%s304 + $0x18] sm:$0xff] %v311
                $region56: #{bilinear_attention.1} parent=50 // loop_footer
                  %s302 = sadd.s32 1, %s298
                $region57: #{bilinear_attention.1} parent=50 // loop_footer_branch
                  %297 = sbr.rel target = $region53
                $region58: #{bilinear_attention.1} parent=50 // loop_exit
                  _
              $region51: #{bilinear_attention.1} parent=35 // pred_fallthru
                _
              // Predicated region
              $region59: #{bilinear_attention.1} parent=35 // pred_check
                _
              $region60: #{bilinear_attention.1} parent=35 // pred_check_branch
                %314 = sbr.rel target = $region62
              $region61: #{bilinear_attention.1} parent=35 // pred_region
                _
              $region62: #{bilinear_attention.1} parent=35 // pred_fallthru
                _
            $region36: #{bilinear_attention.1} parent=31 // pred_fallthru
              _
            // Predicated region
            $region37: #{bilinear_attention.1} parent=31 // pred_check
              _
            $region38: #{bilinear_attention.1} parent=31 // pred_check_branch
              %277 = sbr.rel target = $region40
            $region39: #{bilinear_attention.1} parent=31 // pred_region
              loop: start=0, step=1, limit=1
              $region41: #{bilinear_attention.1} parent=39 // loop_pre_header
                _
              $region42: #{bilinear_attention.1} parent=39 // loop_header
                %s280 = sphi 0, %s284
                %p281 = scmp.ge.s32.totalorder %s280, 1
                %s285 = sphi %s271, %s271
                %s286 = sphi %s267, %s267
              $region43: #{bilinear_attention.1} parent=39 // loop_header_branch
                %283 = sbr.rel (%p281) target = $region47
              $region44: #{bilinear_attention.1} parent=39 // loop_body
                %v287 = vld [vmem:[%s285] sm:$0xff]
                %288 = vst [vmem:[%s286] sm:$0xff] %v287
                %v289 = vld [vmem:[%s285 + $0x10] sm:$0xff]
                %290 = vst [vmem:[%s286 + $0x8] sm:$0xff] %v289
                %v291 = vld [vmem:[%s285 + $0x20] sm:$0xff]
                %292 = vst [vmem:[%s286 + $0x10] sm:$0xff] %v291
                %v293 = vld [vmem:[%s285 + $0x30] sm:$0xff]
                %294 = vst [vmem:[%s286 + $0x18] sm:$0xff] %v293
              $region45: #{bilinear_attention.1} parent=39 // loop_footer
                %s284 = sadd.s32 1, %s280
              $region46: #{bilinear_attention.1} parent=39 // loop_footer_branch
                %279 = sbr.rel target = $region42
              $region47: #{bilinear_attention.1} parent=39 // loop_exit
                _
            $region40: #{bilinear_attention.1} parent=31 // pred_fallthru
              _
          $region32: #{bilinear_attention.1} parent=27 // pred_fallthru
            _
          %315 = vnop
        $region28: #{bilinear_attention.1} parent=19 // pred_fallthru
          _
        // Predicated region
        $region63: #{bilinear_attention.1} parent=19 // pred_check
          %p316 = pneg %p113
        $region64: #{bilinear_attention.1} parent=19 // pred_check_branch
          %318 = sbr.rel (%p316) target = $region66
        $region65: #{bilinear_attention.1} parent=19 // pred_region
          %s319 = smul.u32 16, %s25
          %p320 = scmp.lt.s32.totalorder %s23, 1
          %s321 = scalar_select %p320, %s23, 1
          %p322 = scmp.lt.s32.totalorder %s319, 31
          %s323 = scalar_select %p322, %s319, 31
          %s324 = smul.addr %s321, 32
          %s325 = sadd.s32 %s323, %s324
          %s326 = smul.addr %s325, 4
          %s327 = scalar_lea.vmem %s2, %s326
          %s328 = smul.u32 16, %s25
        $region66: #{bilinear_attention.1} parent=19 // pred_fallthru
          _
      $region20: #{bilinear_attention.1} parent=5 // pred_fallthru
        _
      %p329 = scmp.le.s32.totalorder 1, %s16
      %p330 = scmp.lt.s32.totalorder %s16, 5
      %p331 = pnand %p329, %p330
      %p332 = pneg %p331
      // Predicated region
      $region67: #{bilinear_attention.1} parent=5 // pred_check
        _
      $region68: #{bilinear_attention.1} parent=5 // pred_check_branch
        %334 = sbr.rel (%p331) target = $region70
      $region69: #{bilinear_attention.1} parent=5 // pred_region
        %s335 = ssub.s32 %s16, 1
        %s336 = sand.u32 %s78, 1
        %s337 = sand.u32 %s78, 1
        %s338 = smul.addr %s337, 32
        %s339 = scalar_lea.vmem [#allocation5], %s338
        // Predicated region
        $region71: #{bilinear_attention.1} parent=69 // pred_check
          %p340 = pneg %p91
        $region72: #{bilinear_attention.1} parent=69 // pred_check_branch
          %342 = sbr.rel (%p340) target = $region74
        $region73: #{bilinear_attention.1} parent=69 // pred_region
          _
        $region74: #{bilinear_attention.1} parent=69 // pred_fallthru
          _
        %s343 = smul.u32 2, %s27
        %p344 = scmp.lt.s32.totalorder %s26, 1
        %s345 = scalar_select %p344, %s26, 1
        %p346 = scmp.lt.s32.totalorder %s343, 1
        %s347 = scalar_select %p346, %s343, 1
        %s348 = smul.addr %s345, 2
        %s349 = sadd.s32 %s347, %s348
        %s350 = smul.addr %s349, 8
        %s351 = scalar_lea.vmem %s0, %s350
        %p352 = pneg %p63
        %p353 = pneg %p60
        %s354 = sand.u32 %s78, 1
        %s355 = sand.u32 %s78, 1
        %s356 = smul.addr %s355, 32
        %s357 = scalar_lea.vmem [#allocation5], %s356
        %p358 = pneg %p91
        %p359 = pneg %p88
        %s360 = smul.u32 16, %s28
        %p361 = scmp.lt.s32.totalorder %s26, 1
        %s362 = scalar_select %p361, %s26, 1
        %p363 = scmp.lt.s32.totalorder %s360, 31
        %s364 = scalar_select %p363, %s360, 31
        %s365 = smul.addr %s362, 32
        %s366 = sadd.s32 %s364, %s365
        %s367 = smul.addr %s366, 4
        %s368 = scalar_lea.vmem %s2, %s367
        %p369 = pneg %p119
        %p370 = pneg %p116
        %p371 = pneg %p140
        %p372 = pneg %p137
        %p373 = pneg %p168
        %p374 = pneg %p165
        %s375 = sand.u32 %s155, 1
        %s376 = scalar_lea.sflag [#allocation7], %s375
        %s377 = sand.u32 %s155, 1
        %s378 = smul.addr %s377, 16
        %s379 = scalar_lea.vmem [#allocation6], %s378
        %p380 = pneg %p198
        %p381 = pneg %p195
        %s382 = sand.u32 %s185, 1
        %s383 = sand.u32 %s185, 1
        %s384 = smul.addr %s383, 16
        %s385 = scalar_lea.vmem [#allocation8], %s384
        %p386 = pneg %p226
        %p387 = pneg %p223
        %s388 = smul.u32 2, %s27
        %p389 = scmp.lt.s32.totalorder %s26, 1
        %s390 = scalar_select %p389, %s26, 1
        %p391 = scmp.lt.s32.totalorder %s388, 1
        %s392 = scalar_select %p391, %s388, 1
        %s393 = smul.addr %s390, 2
        %s394 = sadd.s32 %s392, %s393
        %s395 = smul.addr %s394, 8
        %s396 = scalar_lea.vmem %s6, %s395
        %s397 = smul.u32 2, %s27
        %p398 = scmp.lt.s32.totalorder %s26, 1
        %s399 = scalar_select %p398, %s26, 1
        %p400 = scmp.lt.s32.totalorder %s397, 1
        %s401 = scalar_select %p400, %s397, 1
        %s402 = smul.addr %s399, 2
        %s403 = sadd.s32 %s401, %s402
        %s404 = smul.addr %s403, 8
        %s405 = scalar_lea.vmem %s0, %s404
        %s406 = smul.u32 2, %s27
        %s407 = smul.u32 16, %s28
        %p408 = scmp.lt.s32.totalorder %s26, 1
        %s409 = scalar_select %p408, %s26, 1
        %p410 = scmp.lt.s32.totalorder %s407, 31
        %s411 = scalar_select %p410, %s407, 31
        %s412 = smul.addr %s409, 32
        %s413 = sadd.s32 %s411, %s412
        %s414 = smul.addr %s413, 4
        %s415 = scalar_lea.vmem %s2, %s414
        %s416 = smul.u32 16, %s28
        %s417 = smul.u32 2, %s27
        %s418 = smul.u32 2, %s27
        %s419 = smul.u32 2, %s27
        %p420 = scmp.lt.s32.totalorder %s26, 1
        %s421 = scalar_select %p420, %s26, 1
        %p422 = scmp.lt.s32.totalorder %s419, 1
        %s423 = scalar_select %p422, %s419, 1
        %s424 = smul.addr %s421, 2
        %s425 = sadd.s32 %s423, %s424
        %s426 = smul.addr %s425, 8
        %s427 = scalar_lea.vmem %s6, %s426
        %s428 = smul.u32 2, %s27
        %p430 = scmp.eq.s32.totalorder %s28, 0
        // Predicated region
        $region75: #{bilinear_attention.1} parent=69 // pred_check
          %p431 = pneg %p430
        $region76: #{bilinear_attention.1} parent=69 // pred_check_branch
          %433 = sbr.rel (%p431) target = $region78
        $region77: #{bilinear_attention.1} parent=69 // pred_region
          %vm434 = vcmask 7168
          %435 = vst.msk [vmem:[#allocation2] sm:$0xff] %vm434, -inf
          %436 = vst.msk [vmem:[#allocation2 + $0x8] sm:$0xff] %vm434, -inf
          %437 = vst.msk [vmem:[#allocation3] sm:$0xff] %vm434, 0.0
          %438 = vst.msk [vmem:[#allocation3 + $0x8] sm:$0xff] %vm434, 0.0
          %vm439 = vcmask 261120
          %440 = vst.msk [vmem:[#allocation4] sm:$0xff] %vm439, 0.0
          %441 = vst.msk [vmem:[#allocation4 + $0x8] sm:$0xff] %vm439, 0.0
        $region78: #{bilinear_attention.1} parent=69 // pred_fallthru
          _
        %v442 = vld [vmem:[%s405] sm:$0xff]
        %v443 = vld [vmem:[%s405 + $0x8] sm:$0xff]
        %v444 = vld [vmem:[%s339] sm:$0xff]
        %v445 = vld [vmem:[%s339 + $0x8] sm:$0xff]
        %v446 = vld [vmem:[%s339 + $0x10] sm:$0xff]
        %v447 = vld [vmem:[%s339 + $0x18] sm:$0xff]
        %v448 = vld [vmem:[%s3] sm:$0x1]
        %450 = vset.pattern.permute.xlu0 0
        %451 = vperm.xlu0 %450, %v442
        %v452 = vpop.permute.xlu0 %451
        %455 = vset.pattern.permute.xlu0 0
        %456 = vperm.xlu0 %455, %v443
        %v457 = vpop.permute.xlu0 %456
        %v459 = vlaneseq
        %v460 = vshrl.u32 %v459, 7
        %v461 = vsub.s32 0, %v460
        %v462 = vrot.slane %v444, %v461
        %v463 = vadd.f32 %v452, %v462
        %v464 = vadd.f32 %v457, %v462
        %v465 = vtanh.pop %v463
        %v466 = vtanh.pop %v464
        %v468 = vlaneseq
        %v469 = vshrl.u32 %v468, 7
        %v470 = vsub.s32 0, %v469
        %v471 = vrot.slane %v448, %v470
        %472 = vset.pattern.permute.xlu0 0
        %473 = vperm.xlu0 %472, %v471
        %v474 = vpop.permute.xlu0 %473
        %v476 = vmul.f32 %v465, %v474
        %v477 = vmul.f32 %v466, %v474
        %v478 = vadd.f32 %v476, 0.0
        %v479 = vadd.f32 %v477, 0.0
        %480 = vset.pattern.permute.xlu0 1
        %481 = vperm.xlu0 %480, %v442
        %v482 = vpop.permute.xlu0 %481
        %484 = vset.pattern.permute.xlu0 1
        %485 = vperm.xlu0 %484, %v443
        %v486 = vpop.permute.xlu0 %485
        %v488 = vlaneseq
        %v489 = vshrl.u32 %v488, 7
        %v490 = vsub.s32 1, %v489
        %v491 = vrot.slane %v444, %v490
        %v492 = vadd.f32 %v482, %v491
        %v493 = vadd.f32 %v486, %v491
        %v494 = vtanh.pop %v492
        %v495 = vtanh.pop %v493
        %496 = vset.pattern.permute.xlu0 1
        %497 = vperm.xlu0 %496, %v471
        %v498 = vpop.permute.xlu0 %497
        %v500 = vmul.f32 %v494, %v498
        %v501 = vmul.f32 %v495, %v498
        %v502 = vadd.f32 %v478, %v500
        %v503 = vadd.f32 %v479, %v501
        %504 = vset.pattern.permute.xlu0 2
        %505 = vperm.xlu0 %504, %v442
        %v506 = vpop.permute.xlu0 %505
        %508 = vset.pattern.permute.xlu0 2
        %509 = vperm.xlu0 %508, %v443
        %v510 = vpop.permute.xlu0 %509
        %v512 = vlaneseq
        %v513 = vshrl.u32 %v512, 7
        %v514 = vsub.s32 2, %v513
        %v515 = vrot.slane %v444, %v514
        %v516 = vadd.f32 %v506, %v515
        %v517 = vadd.f32 %v510, %v515
        %v518 = vtanh.pop %v516
        %v519 = vtanh.pop %v517
        %520 = vset.pattern.permute.xlu0 2
        %521 = vperm.xlu0 %520, %v471
        %v522 = vpop.permute.xlu0 %521
        %v524 = vmul.f32 %v518, %v522
        %v525 = vmul.f32 %v519, %v522
        %v526 = vadd.f32 %v502, %v524
        %v527 = vadd.f32 %v503, %v525
        %528 = vset.pattern.permute.xlu0 3
        %529 = vperm.xlu0 %528, %v442
        %v530 = vpop.permute.xlu0 %529
        %532 = vset.pattern.permute.xlu0 3
        %533 = vperm.xlu0 %532, %v443
        %v534 = vpop.permute.xlu0 %533
        %v536 = vlaneseq
        %v537 = vshrl.u32 %v536, 7
        %v538 = vsub.s32 3, %v537
        %v539 = vrot.slane %v444, %v538
        %v540 = vadd.f32 %v530, %v539
        %v541 = vadd.f32 %v534, %v539
        %v542 = vtanh.pop %v540
        %v543 = vtanh.pop %v541
        %544 = vset.pattern.permute.xlu0 3
        %545 = vperm.xlu0 %544, %v471
        %v546 = vpop.permute.xlu0 %545
        %v548 = vmul.f32 %v542, %v546
        %v549 = vmul.f32 %v543, %v546
        %v550 = vadd.f32 %v526, %v548
        %v551 = vadd.f32 %v527, %v549
        %552 = vset.pattern.permute.xlu0 4
        %553 = vperm.xlu0 %552, %v442
        %v554 = vpop.permute.xlu0 %553
        %556 = vset.pattern.permute.xlu0 4
        %557 = vperm.xlu0 %556, %v443
        %v558 = vpop.permute.xlu0 %557
        %v560 = vlaneseq
        %v561 = vshrl.u32 %v560, 7
        %v562 = vsub.s32 4, %v561
        %v563 = vrot.slane %v444, %v562
        %v564 = vadd.f32 %v554, %v563
        %v565 = vadd.f32 %v558, %v563
        %v566 = vtanh.pop %v564
        %v567 = vtanh.pop %v565
        %568 = vset.pattern.permute.xlu0 4
        %569 = vperm.xlu0 %568, %v471
        %v570 = vpop.permute.xlu0 %569
        %v572 = vmul.f32 %v566, %v570
        %v573 = vmul.f32 %v567, %v570
        %v574 = vadd.f32 %v550, %v572
        %v575 = vadd.f32 %v551, %v573
        %576 = vset.pattern.permute.xlu0 5
        %577 = vperm.xlu0 %576, %v442
        %v578 = vpop.permute.xlu0 %577
        %580 = vset.pattern.permute.xlu0 5
        %581 = vperm.xlu0 %580, %v443
        %v582 = vpop.permute.xlu0 %581
        %v584 = vlaneseq
        %v585 = vshrl.u32 %v584, 7
        %v586 = vsub.s32 5, %v585
        %v587 = vrot.slane %v444, %v586
        %v588 = vadd.f32 %v578, %v587
        %v589 = vadd.f32 %v582, %v587
        %v590 = vtanh.pop %v588
        %v591 = vtanh.pop %v589
        %592 = vset.pattern.permute.xlu0 5
        %593 = vperm.xlu0 %592, %v471
        %v594 = vpop.permute.xlu0 %593
        %v596 = vmul.f32 %v590, %v594
        %v597 = vmul.f32 %v591, %v594
        %v598 = vadd.f32 %v574, %v596
        %v599 = vadd.f32 %v575, %v597
        %600 = vset.pattern.permute.xlu0 6
        %601 = vperm.xlu0 %600, %v442
        %v602 = vpop.permute.xlu0 %601
        %604 = vset.pattern.permute.xlu0 6
        %605 = vperm.xlu0 %604, %v443
        %v606 = vpop.permute.xlu0 %605
        %v608 = vlaneseq
        %v609 = vshrl.u32 %v608, 7
        %v610 = vsub.s32 6, %v609
        %v611 = vrot.slane %v444, %v610
        %v612 = vadd.f32 %v602, %v611
        %v613 = vadd.f32 %v606, %v611
        %v614 = vtanh.pop %v612
        %v615 = vtanh.pop %v613
        %616 = vset.pattern.permute.xlu0 6
        %617 = vperm.xlu0 %616, %v471
        %v618 = vpop.permute.xlu0 %617
        %v620 = vmul.f32 %v614, %v618
        %v621 = vmul.f32 %v615, %v618
        %v622 = vadd.f32 %v598, %v620
        %v623 = vadd.f32 %v599, %v621
        %624 = vset.pattern.permute.xlu0 7
        %625 = vperm.xlu0 %624, %v442
        %v626 = vpop.permute.xlu0 %625
        %628 = vset.pattern.permute.xlu0 7
        %629 = vperm.xlu0 %628, %v443
        %v630 = vpop.permute.xlu0 %629
        %v632 = vlaneseq
        %v633 = vshrl.u32 %v632, 7
        %v634 = vsub.s32 7, %v633
        %v635 = vrot.slane %v444, %v634
        %v636 = vadd.f32 %v626, %v635
        %v637 = vadd.f32 %v630, %v635
        %v638 = vtanh.pop %v636
        %v639 = vtanh.pop %v637
        %640 = vset.pattern.permute.xlu0 7
        %641 = vperm.xlu0 %640, %v471
        %v642 = vpop.permute.xlu0 %641
        %v644 = vmul.f32 %v638, %v642
        %v645 = vmul.f32 %v639, %v642
        %v646 = vadd.f32 %v622, %v644
        %v647 = vadd.f32 %v623, %v645
        %648 = vset.pattern.permute.xlu0 8
        %649 = vperm.xlu0 %648, %v442
        %v650 = vpop.permute.xlu0 %649
        %652 = vset.pattern.permute.xlu0 8
        %653 = vperm.xlu0 %652, %v443
        %v654 = vpop.permute.xlu0 %653
        %v656 = vlaneseq
        %v657 = vshrl.u32 %v656, 7
        %v658 = vsub.s32 0, %v657
        %v659 = vrot.slane %v445, %v658
        %v660 = vadd.f32 %v650, %v659
        %v661 = vadd.f32 %v654, %v659
        %v662 = vtanh.pop %v660
        %v663 = vtanh.pop %v661
        %664 = vset.pattern.permute.xlu0 8
        %665 = vperm.xlu0 %664, %v471
        %v666 = vpop.permute.xlu0 %665
        %v668 = vmul.f32 %v662, %v666
        %v669 = vmul.f32 %v663, %v666
        %v670 = vadd.f32 %v646, %v668
        %v671 = vadd.f32 %v647, %v669
        %672 = vset.pattern.permute.xlu0 9
        %673 = vperm.xlu0 %672, %v442
        %v674 = vpop.permute.xlu0 %673
        %676 = vset.pattern.permute.xlu0 9
        %677 = vperm.xlu0 %676, %v443
        %v678 = vpop.permute.xlu0 %677
        %v680 = vlaneseq
        %v681 = vshrl.u32 %v680, 7
        %v682 = vsub.s32 1, %v681
        %v683 = vrot.slane %v445, %v682
        %v684 = vadd.f32 %v674, %v683
        %v685 = vadd.f32 %v678, %v683
        %v686 = vtanh.pop %v684
        %v687 = vtanh.pop %v685
        %688 = vset.pattern.permute.xlu0 9
        %689 = vperm.xlu0 %688, %v471
        %v690 = vpop.permute.xlu0 %689
        %v692 = vmul.f32 %v686, %v690
        %v693 = vmul.f32 %v687, %v690
        %v694 = vadd.f32 %v670, %v692
        %v695 = vadd.f32 %v671, %v693
        %696 = vset.pattern.permute.xlu0 10
        %697 = vperm.xlu0 %696, %v442
        %v698 = vpop.permute.xlu0 %697
        %700 = vset.pattern.permute.xlu0 10
        %701 = vperm.xlu0 %700, %v443
        %v702 = vpop.permute.xlu0 %701
        %v704 = vlaneseq
        %v705 = vshrl.u32 %v704, 7
        %v706 = vsub.s32 2, %v705
        %v707 = vrot.slane %v445, %v706
        %v708 = vadd.f32 %v698, %v707
        %v709 = vadd.f32 %v702, %v707
        %v710 = vtanh.pop %v708
        %v711 = vtanh.pop %v709
        %712 = vset.pattern.permute.xlu0 10
        %713 = vperm.xlu0 %712, %v471
        %v714 = vpop.permute.xlu0 %713
        %v716 = vmul.f32 %v710, %v714
        %v717 = vmul.f32 %v711, %v714
        %v718 = vadd.f32 %v694, %v716
        %v719 = vadd.f32 %v695, %v717
        %720 = vset.pattern.permute.xlu0 11
        %721 = vperm.xlu0 %720, %v442
        %v722 = vpop.permute.xlu0 %721
        %724 = vset.pattern.permute.xlu0 11
        %725 = vperm.xlu0 %724, %v443
        %v726 = vpop.permute.xlu0 %725
        %v728 = vlaneseq
        %v729 = vshrl.u32 %v728, 7
        %v730 = vsub.s32 3, %v729
        %v731 = vrot.slane %v445, %v730
        %v732 = vadd.f32 %v722, %v731
        %v733 = vadd.f32 %v726, %v731
        %v734 = vtanh.pop %v732
        %v735 = vtanh.pop %v733
        %736 = vset.pattern.permute.xlu0 11
        %737 = vperm.xlu0 %736, %v471
        %v738 = vpop.permute.xlu0 %737
        %v740 = vmul.f32 %v734, %v738
        %v741 = vmul.f32 %v735, %v738
        %v742 = vadd.f32 %v718, %v740
        %v743 = vadd.f32 %v719, %v741
        %744 = vset.pattern.permute.xlu0 12
        %745 = vperm.xlu0 %744, %v442
        %v746 = vpop.permute.xlu0 %745
        %748 = vset.pattern.permute.xlu0 12
        %749 = vperm.xlu0 %748, %v443
        %v750 = vpop.permute.xlu0 %749
        %v752 = vlaneseq
        %v753 = vshrl.u32 %v752, 7
        %v754 = vsub.s32 4, %v753
        %v755 = vrot.slane %v445, %v754
        %v756 = vadd.f32 %v746, %v755
        %v757 = vadd.f32 %v750, %v755
        %v758 = vtanh.pop %v756
        %v759 = vtanh.pop %v757
        %760 = vset.pattern.permute.xlu0 12
        %761 = vperm.xlu0 %760, %v471
        %v762 = vpop.permute.xlu0 %761
        %v764 = vmul.f32 %v758, %v762
        %v765 = vmul.f32 %v759, %v762
        %v766 = vadd.f32 %v742, %v764
        %v767 = vadd.f32 %v743, %v765
        %768 = vset.pattern.permute.xlu0 13
        %769 = vperm.xlu0 %768, %v442
        %v770 = vpop.permute.xlu0 %769
        %772 = vset.pattern.permute.xlu0 13
        %773 = vperm.xlu0 %772, %v443
        %v774 = vpop.permute.xlu0 %773
        %v776 = vlaneseq
        %v777 = vshrl.u32 %v776, 7
        %v778 = vsub.s32 5, %v777
        %v779 = vrot.slane %v445, %v778
        %v780 = vadd.f32 %v770, %v779
        %v781 = vadd.f32 %v774, %v779
        %v782 = vtanh.pop %v780
        %v783 = vtanh.pop %v781
        %784 = vset.pattern.permute.xlu0 13
        %785 = vperm.xlu0 %784, %v471
        %v786 = vpop.permute.xlu0 %785
        %v788 = vmul.f32 %v782, %v786
        %v789 = vmul.f32 %v783, %v786
        %v790 = vadd.f32 %v766, %v788
        %v791 = vadd.f32 %v767, %v789
        %792 = vset.pattern.permute.xlu0 14
        %793 = vperm.xlu0 %792, %v442
        %v794 = vpop.permute.xlu0 %793
        %796 = vset.pattern.permute.xlu0 14
        %797 = vperm.xlu0 %796, %v443
        %v798 = vpop.permute.xlu0 %797
        %v800 = vlaneseq
        %v801 = vshrl.u32 %v800, 7
        %v802 = vsub.s32 6, %v801
        %v803 = vrot.slane %v445, %v802
        %v804 = vadd.f32 %v794, %v803
        %v805 = vadd.f32 %v798, %v803
        %v806 = vtanh.pop %v804
        %v807 = vtanh.pop %v805
        %808 = vset.pattern.permute.xlu0 14
        %809 = vperm.xlu0 %808, %v471
        %v810 = vpop.permute.xlu0 %809
        %v812 = vmul.f32 %v806, %v810
        %v813 = vmul.f32 %v807, %v810
        %v814 = vadd.f32 %v790, %v812
        %v815 = vadd.f32 %v791, %v813
        %816 = vset.pattern.permute.xlu0 15
        %817 = vperm.xlu0 %816, %v442
        %v818 = vpop.permute.xlu0 %817
        %820 = vset.pattern.permute.xlu0 15
        %821 = vperm.xlu0 %820, %v443
        %v822 = vpop.permute.xlu0 %821
        %v824 = vlaneseq
        %v825 = vshrl.u32 %v824, 7
        %v826 = vsub.s32 7, %v825
        %v827 = vrot.slane %v445, %v826
        %v828 = vadd.f32 %v818, %v827
        %v829 = vadd.f32 %v822, %v827
        %v830 = vtanh.pop %v828
        %v831 = vtanh.pop %v829
        %832 = vset.pattern.permute.xlu0 15
        %833 = vperm.xlu0 %832, %v471
        %v834 = vpop.permute.xlu0 %833
        %v836 = vmul.f32 %v830, %v834
        %v837 = vmul.f32 %v831, %v834
        %v838 = vadd.f32 %v814, %v836
        %v839 = vadd.f32 %v815, %v837
        %840 = vset.pattern.permute.xlu0 16
        %841 = vperm.xlu0 %840, %v442
        %v842 = vpop.permute.xlu0 %841
        %844 = vset.pattern.permute.xlu0 16
        %845 = vperm.xlu0 %844, %v443
        %v846 = vpop.permute.xlu0 %845
        %v848 = vlaneseq
        %v849 = vshrl.u32 %v848, 7
        %v850 = vsub.s32 0, %v849
        %v851 = vrot.slane %v446, %v850
        %v852 = vadd.f32 %v842, %v851
        %v853 = vadd.f32 %v846, %v851
        %v854 = vtanh.pop %v852
        %v855 = vtanh.pop %v853
        %856 = vset.pattern.permute.xlu0 16
        %857 = vperm.xlu0 %856, %v471
        %v858 = vpop.permute.xlu0 %857
        %v860 = vmul.f32 %v854, %v858
        %v861 = vmul.f32 %v855, %v858
        %v862 = vadd.f32 %v838, %v860
        %v863 = vadd.f32 %v839, %v861
        %864 = vset.pattern.permute.xlu0 17
        %865 = vperm.xlu0 %864, %v442
        %v866 = vpop.permute.xlu0 %865
        %868 = vset.pattern.permute.xlu0 17
        %869 = vperm.xlu0 %868, %v443
        %v870 = vpop.permute.xlu0 %869
        %v872 = vlaneseq
        %v873 = vshrl.u32 %v872, 7
        %v874 = vsub.s32 1, %v873
        %v875 = vrot.slane %v446, %v874
        %v876 = vadd.f32 %v866, %v875
        %v877 = vadd.f32 %v870, %v875
        %v878 = vtanh.pop %v876
        %v879 = vtanh.pop %v877
        %880 = vset.pattern.permute.xlu0 17
        %881 = vperm.xlu0 %880, %v471
        %v882 = vpop.permute.xlu0 %881
        %v884 = vmul.f32 %v878, %v882
        %v885 = vmul.f32 %v879, %v882
        %v886 = vadd.f32 %v862, %v884
        %v887 = vadd.f32 %v863, %v885
        %888 = vset.pattern.permute.xlu0 18
        %889 = vperm.xlu0 %888, %v442
        %v890 = vpop.permute.xlu0 %889
        %892 = vset.pattern.permute.xlu0 18
        %893 = vperm.xlu0 %892, %v443
        %v894 = vpop.permute.xlu0 %893
        %v896 = vlaneseq
        %v897 = vshrl.u32 %v896, 7
        %v898 = vsub.s32 2, %v897
        %v899 = vrot.slane %v446, %v898
        %v900 = vadd.f32 %v890, %v899
        %v901 = vadd.f32 %v894, %v899
        %v902 = vtanh.pop %v900
        %v903 = vtanh.pop %v901
        %904 = vset.pattern.permute.xlu0 18
        %905 = vperm.xlu0 %904, %v471
        %v906 = vpop.permute.xlu0 %905
        %v908 = vmul.f32 %v902, %v906
        %v909 = vmul.f32 %v903, %v906
        %v910 = vadd.f32 %v886, %v908
        %v911 = vadd.f32 %v887, %v909
        %912 = vset.pattern.permute.xlu0 19
        %913 = vperm.xlu0 %912, %v442
        %v914 = vpop.permute.xlu0 %913
        %916 = vset.pattern.permute.xlu0 19
        %917 = vperm.xlu0 %916, %v443
        %v918 = vpop.permute.xlu0 %917
        %v920 = vlaneseq
        %v921 = vshrl.u32 %v920, 7
        %v922 = vsub.s32 3, %v921
        %v923 = vrot.slane %v446, %v922
        %v924 = vadd.f32 %v914, %v923
        %v925 = vadd.f32 %v918, %v923
        %v926 = vtanh.pop %v924
        %v927 = vtanh.pop %v925
        %928 = vset.pattern.permute.xlu0 19
        %929 = vperm.xlu0 %928, %v471
        %v930 = vpop.permute.xlu0 %929
        %v932 = vmul.f32 %v926, %v930
        %v933 = vmul.f32 %v927, %v930
        %v934 = vadd.f32 %v910, %v932
        %v935 = vadd.f32 %v911, %v933
        %936 = vset.pattern.permute.xlu0 20
        %937 = vperm.xlu0 %936, %v442
        %v938 = vpop.permute.xlu0 %937
        %940 = vset.pattern.permute.xlu0 20
        %941 = vperm.xlu0 %940, %v443
        %v942 = vpop.permute.xlu0 %941
        %v944 = vlaneseq
        %v945 = vshrl.u32 %v944, 7
        %v946 = vsub.s32 4, %v945
        %v947 = vrot.slane %v446, %v946
        %v948 = vadd.f32 %v938, %v947
        %v949 = vadd.f32 %v942, %v947
        %v950 = vtanh.pop %v948
        %v951 = vtanh.pop %v949
        %952 = vset.pattern.permute.xlu0 20
        %953 = vperm.xlu0 %952, %v471
        %v954 = vpop.permute.xlu0 %953
        %v956 = vmul.f32 %v950, %v954
        %v957 = vmul.f32 %v951, %v954
        %v958 = vadd.f32 %v934, %v956
        %v959 = vadd.f32 %v935, %v957
        %960 = vset.pattern.permute.xlu0 21
        %961 = vperm.xlu0 %960, %v442
        %v962 = vpop.permute.xlu0 %961
        %964 = vset.pattern.permute.xlu0 21
        %965 = vperm.xlu0 %964, %v443
        %v966 = vpop.permute.xlu0 %965
        %v968 = vlaneseq
        %v969 = vshrl.u32 %v968, 7
        %v970 = vsub.s32 5, %v969
        %v971 = vrot.slane %v446, %v970
        %v972 = vadd.f32 %v962, %v971
        %v973 = vadd.f32 %v966, %v971
        %v974 = vtanh.pop %v972
        %v975 = vtanh.pop %v973
        %976 = vset.pattern.permute.xlu0 21
        %977 = vperm.xlu0 %976, %v471
        %v978 = vpop.permute.xlu0 %977
        %v980 = vmul.f32 %v974, %v978
        %v981 = vmul.f32 %v975, %v978
        %v982 = vadd.f32 %v958, %v980
        %v983 = vadd.f32 %v959, %v981
        %984 = vset.pattern.permute.xlu0 22
        %985 = vperm.xlu0 %984, %v442
        %v986 = vpop.permute.xlu0 %985
        %988 = vset.pattern.permute.xlu0 22
        %989 = vperm.xlu0 %988, %v443
        %v990 = vpop.permute.xlu0 %989
        %v992 = vlaneseq
        %v993 = vshrl.u32 %v992, 7
        %v994 = vsub.s32 6, %v993
        %v995 = vrot.slane %v446, %v994
        %v996 = vadd.f32 %v986, %v995
        %v997 = vadd.f32 %v990, %v995
        %v998 = vtanh.pop %v996
        %v999 = vtanh.pop %v997
        %1000 = vset.pattern.permute.xlu0 22
        %1001 = vperm.xlu0 %1000, %v471
        %v1002 = vpop.permute.xlu0 %1001
        %v1004 = vmul.f32 %v998, %v1002
        %v1005 = vmul.f32 %v999, %v1002
        %v1006 = vadd.f32 %v982, %v1004
        %v1007 = vadd.f32 %v983, %v1005
        %1008 = vset.pattern.permute.xlu0 23
        %1009 = vperm.xlu0 %1008, %v442
        %v1010 = vpop.permute.xlu0 %1009
        %1012 = vset.pattern.permute.xlu0 23
        %1013 = vperm.xlu0 %1012, %v443
        %v1014 = vpop.permute.xlu0 %1013
        %v1016 = vlaneseq
        %v1017 = vshrl.u32 %v1016, 7
        %v1018 = vsub.s32 7, %v1017
        %v1019 = vrot.slane %v446, %v1018
        %v1020 = vadd.f32 %v1010, %v1019
        %v1021 = vadd.f32 %v1014, %v1019
        %v1022 = vtanh.pop %v1020
        %v1023 = vtanh.pop %v1021
        %1024 = vset.pattern.permute.xlu0 23
        %1025 = vperm.xlu0 %1024, %v471
        %v1026 = vpop.permute.xlu0 %1025
        %v1028 = vmul.f32 %v1022, %v1026
        %v1029 = vmul.f32 %v1023, %v1026
        %v1030 = vadd.f32 %v1006, %v1028
        %v1031 = vadd.f32 %v1007, %v1029
        %1032 = vset.pattern.permute.xlu0 24
        %1033 = vperm.xlu0 %1032, %v442
        %v1034 = vpop.permute.xlu0 %1033
        %1036 = vset.pattern.permute.xlu0 24
        %1037 = vperm.xlu0 %1036, %v443
        %v1038 = vpop.permute.xlu0 %1037
        %v1040 = vlaneseq
        %v1041 = vshrl.u32 %v1040, 7
        %v1042 = vsub.s32 0, %v1041
        %v1043 = vrot.slane %v447, %v1042
        %v1044 = vadd.f32 %v1034, %v1043
        %v1045 = vadd.f32 %v1038, %v1043
        %v1046 = vtanh.pop %v1044
        %v1047 = vtanh.pop %v1045
        %1048 = vset.pattern.permute.xlu0 24
        %1049 = vperm.xlu0 %1048, %v471
        %v1050 = vpop.permute.xlu0 %1049
        %v1052 = vmul.f32 %v1046, %v1050
        %v1053 = vmul.f32 %v1047, %v1050
        %v1054 = vadd.f32 %v1030, %v1052
        %v1055 = vadd.f32 %v1031, %v1053
        %1056 = vset.pattern.permute.xlu0 25
        %1057 = vperm.xlu0 %1056, %v442
        %v1058 = vpop.permute.xlu0 %1057
        %1060 = vset.pattern.permute.xlu0 25
        %1061 = vperm.xlu0 %1060, %v443
        %v1062 = vpop.permute.xlu0 %1061
        %v1064 = vlaneseq
        %v1065 = vshrl.u32 %v1064, 7
        %v1066 = vsub.s32 1, %v1065
        %v1067 = vrot.slane %v447, %v1066
        %v1068 = vadd.f32 %v1058, %v1067
        %v1069 = vadd.f32 %v1062, %v1067
        %v1070 = vtanh.pop %v1068
        %v1071 = vtanh.pop %v1069
        %1072 = vset.pattern.permute.xlu0 25
        %1073 = vperm.xlu0 %1072, %v471
        %v1074 = vpop.permute.xlu0 %1073
        %v1076 = vmul.f32 %v1070, %v1074
        %v1077 = vmul.f32 %v1071, %v1074
        %v1078 = vadd.f32 %v1054, %v1076
        %v1079 = vadd.f32 %v1055, %v1077
        %1080 = vset.pattern.permute.xlu0 26
        %1081 = vperm.xlu0 %1080, %v442
        %v1082 = vpop.permute.xlu0 %1081
        %1084 = vset.pattern.permute.xlu0 26
        %1085 = vperm.xlu0 %1084, %v443
        %v1086 = vpop.permute.xlu0 %1085
        %v1088 = vlaneseq
        %v1089 = vshrl.u32 %v1088, 7
        %v1090 = vsub.s32 2, %v1089
        %v1091 = vrot.slane %v447, %v1090
        %v1092 = vadd.f32 %v1082, %v1091
        %v1093 = vadd.f32 %v1086, %v1091
        %v1094 = vtanh.pop %v1092
        %v1095 = vtanh.pop %v1093
        %1096 = vset.pattern.permute.xlu0 26
        %1097 = vperm.xlu0 %1096, %v471
        %v1098 = vpop.permute.xlu0 %1097
        %v1100 = vmul.f32 %v1094, %v1098
        %v1101 = vmul.f32 %v1095, %v1098
        %v1102 = vadd.f32 %v1078, %v1100
        %v1103 = vadd.f32 %v1079, %v1101
        %1104 = vset.pattern.permute.xlu0 27
        %1105 = vperm.xlu0 %1104, %v442
        %v1106 = vpop.permute.xlu0 %1105
        %1108 = vset.pattern.permute.xlu0 27
        %1109 = vperm.xlu0 %1108, %v443
        %v1110 = vpop.permute.xlu0 %1109
        %v1112 = vlaneseq
        %v1113 = vshrl.u32 %v1112, 7
        %v1114 = vsub.s32 3, %v1113
        %v1115 = vrot.slane %v447, %v1114
        %v1116 = vadd.f32 %v1106, %v1115
        %v1117 = vadd.f32 %v1110, %v1115
        %v1118 = vtanh.pop %v1116
        %v1119 = vtanh.pop %v1117
        %1120 = vset.pattern.permute.xlu0 27
        %1121 = vperm.xlu0 %1120, %v471
        %v1122 = vpop.permute.xlu0 %1121
        %v1124 = vmul.f32 %v1118, %v1122
        %v1125 = vmul.f32 %v1119, %v1122
        %v1126 = vadd.f32 %v1102, %v1124
        %v1127 = vadd.f32 %v1103, %v1125
        %1128 = vset.pattern.permute.xlu0 28
        %1129 = vperm.xlu0 %1128, %v442
        %v1130 = vpop.permute.xlu0 %1129
        %1132 = vset.pattern.permute.xlu0 28
        %1133 = vperm.xlu0 %1132, %v443
        %v1134 = vpop.permute.xlu0 %1133
        %v1136 = vlaneseq
        %v1137 = vshrl.u32 %v1136, 7
        %v1138 = vsub.s32 4, %v1137
        %v1139 = vrot.slane %v447, %v1138
        %v1140 = vadd.f32 %v1130, %v1139
        %v1141 = vadd.f32 %v1134, %v1139
        %v1142 = vtanh.pop %v1140
        %v1143 = vtanh.pop %v1141
        %1144 = vset.pattern.permute.xlu0 28
        %1145 = vperm.xlu0 %1144, %v471
        %v1146 = vpop.permute.xlu0 %1145
        %v1148 = vmul.f32 %v1142, %v1146
        %v1149 = vmul.f32 %v1143, %v1146
        %v1150 = vadd.f32 %v1126, %v1148
        %v1151 = vadd.f32 %v1127, %v1149
        %1152 = vset.pattern.permute.xlu0 29
        %1153 = vperm.xlu0 %1152, %v442
        %v1154 = vpop.permute.xlu0 %1153
        %1156 = vset.pattern.permute.xlu0 29
        %1157 = vperm.xlu0 %1156, %v443
        %v1158 = vpop.permute.xlu0 %1157
        %v1160 = vlaneseq
        %v1161 = vshrl.u32 %v1160, 7
        %v1162 = vsub.s32 5, %v1161
        %v1163 = vrot.slane %v447, %v1162
        %v1164 = vadd.f32 %v1154, %v1163
        %v1165 = vadd.f32 %v1158, %v1163
        %v1166 = vtanh.pop %v1164
        %v1167 = vtanh.pop %v1165
        %1168 = vset.pattern.permute.xlu0 29
        %1169 = vperm.xlu0 %1168, %v471
        %v1170 = vpop.permute.xlu0 %1169
        %v1172 = vmul.f32 %v1166, %v1170
        %v1173 = vmul.f32 %v1167, %v1170
        %v1174 = vadd.f32 %v1150, %v1172
        %v1175 = vadd.f32 %v1151, %v1173
        %1176 = vset.pattern.permute.xlu0 30
        %1177 = vperm.xlu0 %1176, %v442
        %v1178 = vpop.permute.xlu0 %1177
        %1180 = vset.pattern.permute.xlu0 30
        %1181 = vperm.xlu0 %1180, %v443
        %v1182 = vpop.permute.xlu0 %1181
        %v1184 = vlaneseq
        %v1185 = vshrl.u32 %v1184, 7
        %v1186 = vsub.s32 6, %v1185
        %v1187 = vrot.slane %v447, %v1186
        %v1188 = vadd.f32 %v1178, %v1187
        %v1189 = vadd.f32 %v1182, %v1187
        %v1190 = vtanh.pop %v1188
        %v1191 = vtanh.pop %v1189
        %1192 = vset.pattern.permute.xlu0 30
        %1193 = vperm.xlu0 %1192, %v471
        %v1194 = vpop.permute.xlu0 %1193
        %v1196 = vmul.f32 %v1190, %v1194
        %v1197 = vmul.f32 %v1191, %v1194
        %v1198 = vadd.f32 %v1174, %v1196
        %v1199 = vadd.f32 %v1175, %v1197
        %1200 = vset.pattern.permute.xlu0 31
        %1201 = vperm.xlu0 %1200, %v442
        %v1202 = vpop.permute.xlu0 %1201
        %1204 = vset.pattern.permute.xlu0 31
        %1205 = vperm.xlu0 %1204, %v443
        %v1206 = vpop.permute.xlu0 %1205
        %v1208 = vlaneseq
        %v1209 = vshrl.u32 %v1208, 7
        %v1210 = vsub.s32 7, %v1209
        %v1211 = vrot.slane %v447, %v1210
        %v1212 = vadd.f32 %v1202, %v1211
        %v1213 = vadd.f32 %v1206, %v1211
        %v1214 = vtanh.pop %v1212
        %v1215 = vtanh.pop %v1213
        %1216 = vset.pattern.permute.xlu0 31
        %1217 = vperm.xlu0 %1216, %v471
        %v1218 = vpop.permute.xlu0 %1217
        %v1220 = vmul.f32 %v1214, %v1218
        %v1221 = vmul.f32 %v1215, %v1218
        %v1222 = vadd.f32 %v1198, %v1220
        %v1223 = vadd.f32 %v1199, %v1221
        %1224 = vst [vmem:[%s385] sm:$0xff] %v1222
        %1225 = vst [vmem:[%s385 + $0x8] sm:$0xff] %v1223
        %v1226 = vld [vmem:[#allocation2] sm:$0xff]
        %v1227 = vld [vmem:[#allocation2 + $0x8] sm:$0xff]
        %1228 = vmax.xlane.f32.xlu0 %v1222
        %v1229 = vpop.xlane.xlu0 %1228
        %1230 = vmax.xlane.f32.xlu0 %v1223
        %v1231 = vpop.xlane.xlu0 %1230
        %v1232 = vmax.f32 %v1226, %v1229
        %v1233 = vmax.f32 %v1227, %v1231
        %v1234 = vsub.f32 %v1226, %v1232
        %v1235 = vsub.f32 %v1227, %v1233
        %v1236 = vmul.f32 %v1234, 1.442695
        %v1237 = vpow.pop %v1236
        %v1238 = vmul.f32 %v1235, 1.442695
        %v1239 = vpow.pop %v1238
        %1241 = vset.pattern.permute.xlu0 0
        %1242 = vperm.xlu0 %1241, %v1232
        %v1243 = vpop.permute.xlu0 %1242
        %1246 = vset.pattern.permute.xlu0 0
        %1247 = vperm.xlu0 %1246, %v1233
        %v1248 = vpop.permute.xlu0 %1247
        %v1250 = vsub.f32 %v1222, %v1243
        %v1251 = vsub.f32 %v1223, %v1248
        %v1252 = vmul.f32 %v1250, 1.442695
        %v1253 = vpow.pop %v1252
        %v1254 = vmul.f32 %v1251, 1.442695
        %v1255 = vpow.pop %v1254
        %v1256 = vld [vmem:[#allocation3] sm:$0xff]
        %v1257 = vld [vmem:[#allocation3 + $0x8] sm:$0xff]
        %v1258 = vmul.f32 %v1237, %v1256
        %v1259 = vmul.f32 %v1239, %v1257
        %1260 = vadd.xlane.f32.xlu0 %v1253
        %v1261 = vpop.xlane.xlu0 %1260
        %1262 = vadd.xlane.f32.xlu0 %v1255
        %v1263 = vpop.xlane.xlu0 %1262
        %v1264 = vadd.f32 %v1258, %v1261
        %v1265 = vadd.f32 %v1259, %v1263
        %vm1266 = vcmask 7168
        %1267 = vst.msk [vmem:[#allocation3] sm:$0xff] %vm1266, %v1264
        %1268 = vst.msk [vmem:[#allocation3 + $0x8] sm:$0xff] %vm1266, %v1265
        %v1269 = vld [vmem:[#allocation4] sm:$0xff]
        %v1270 = vld [vmem:[#allocation4 + $0x8] sm:$0xff]
        %1272 = vset.pattern.permute.xlu0 0
        %1273 = vperm.xlu0 %1272, %v1237
        %v1274 = vpop.permute.xlu0 %1273
        %1277 = vset.pattern.permute.xlu0 0
        %1278 = vperm.xlu0 %1277, %v1239
        %v1279 = vpop.permute.xlu0 %1278
        %v1281 = vmul.f32 %v1274, %v1269
        %v1282 = vmul.f32 %v1279, %v1270
        %v1283 = vpack.c.bf16 %v1255, %v1253
        %v1284 = vld [vmem:[%s415] sm:$0xf]
        %v1285 = vld [vmem:[%s415 + $0x4] sm:$0xf]
        %v1286 = vld [vmem:[%s415 + $0x8] sm:$0xf]
        %v1287 = vld [vmem:[%s415 + $0xc] sm:$0xf]
        %v1288 = vld [vmem:[%s415 + $0x10] sm:$0xf]
        %v1289 = vld [vmem:[%s415 + $0x14] sm:$0xf]
        %v1290 = vld [vmem:[%s415 + $0x18] sm:$0xf]
        %v1291 = vld [vmem:[%s415 + $0x1c] sm:$0xf]
        %v1292 = vld [vmem:[%s415 + $0x20] sm:$0xf]
        %v1293 = vld [vmem:[%s415 + $0x24] sm:$0xf]
        %v1294 = vld [vmem:[%s415 + $0x28] sm:$0xf]
        %v1295 = vld [vmem:[%s415 + $0x2c] sm:$0xf]
        %v1296 = vld [vmem:[%s415 + $0x30] sm:$0xf]
        %v1297 = vld [vmem:[%s415 + $0x34] sm:$0xf]
        %v1298 = vld [vmem:[%s415 + $0x38] sm:$0xf]
        %v1299 = vld [vmem:[%s415 + $0x3c] sm:$0xf]
        %v1316 = vunpack.c.l.b16 %v1284
        %v1317 = vunpack.c.l.b16 %v1285
        %v1318 = vunpack.c.l.b16 %v1286
        %v1319 = vunpack.c.l.b16 %v1287
        %v1320 = vunpack.c.l.b16 %v1288
        %v1321 = vunpack.c.l.b16 %v1289
        %v1322 = vunpack.c.l.b16 %v1290
        %v1323 = vunpack.c.l.b16 %v1291
        %v1324 = vunpack.c.l.b16 %v1292
        %v1325 = vunpack.c.l.b16 %v1293
        %v1326 = vunpack.c.l.b16 %v1294
        %v1327 = vunpack.c.l.b16 %v1295
        %v1328 = vunpack.c.l.b16 %v1296
        %v1329 = vunpack.c.l.b16 %v1297
        %v1330 = vunpack.c.l.b16 %v1298
        %v1331 = vunpack.c.l.b16 %v1299
        %v1332 = vpack.c.b16 %v1317, %v1316
        %v1333 = vpack.c.b16 %v1319, %v1318
        %v1334 = vpack.c.b16 %v1321, %v1320
        %v1335 = vpack.c.b16 %v1323, %v1322
        %v1336 = vpack.c.b16 %v1325, %v1324
        %v1337 = vpack.c.b16 %v1327, %v1326
        %v1338 = vpack.c.b16 %v1329, %v1328
        %v1339 = vpack.c.b16 %v1331, %v1330
        %1348 = vmatprep.subr.bf16.mxu0 0
        %1349 = vmatpush1.bf16.msra.mxu0 %v1332
        %1350 = vmatprep.subr.bf16.mxu0 0
        %1351 = vmatpush1.bf16.msra.mxu0 %v1333
        %1352 = vmatprep.subr.bf16.mxu0 0
        %1353 = vmatpush1.bf16.msra.mxu0 %v1334
        %1354 = vmatprep.subr.bf16.mxu0 0
        %1355 = vmatpush1.bf16.msra.mxu0 %v1335
        %1356 = vmatprep.subr.bf16.mxu0 0
        %1357 = vmatpush1.bf16.msra.mxu0 %v1336
        %1358 = vmatprep.subr.bf16.mxu0 0
        %1359 = vmatpush1.bf16.msra.mxu0 %v1337
        %1360 = vmatprep.subr.bf16.mxu0 0
        %1361 = vmatpush1.bf16.msra.mxu0 %v1338
        %1362 = vmatprep.subr.bf16.mxu0 0
        %1363 = vmatpush1.bf16.msra.mxu0 %v1339
        %1364 = vmatprep.subr.bf16.mxu0 0
        %1365 = vmatpush1.bf16.msra.mxu0 0
        %1366 = vmatprep.subr.bf16.mxu0 0
        %1367 = vmatpush1.bf16.msra.mxu0 0
        %1368 = vmatprep.subr.bf16.mxu0 0
        %1369 = vmatpush1.bf16.msra.mxu0 0
        %1370 = vmatprep.subr.bf16.mxu0 0
        %1371 = vmatpush1.bf16.msra.mxu0 0
        %1372 = vmatprep.subr.bf16.mxu0 0
        %1373 = vmatpush1.bf16.msra.mxu0 0
        %1374 = vmatprep.subr.bf16.mxu0 0
        %1375 = vmatpush1.bf16.msra.mxu0 0
        %1376 = vmatprep.subr.bf16.mxu0 0
        %1377 = vmatpush1.bf16.msra.mxu0 0
        %1378 = vmatprep.subr.bf16.mxu0 0
        %1379 = vmatpush1.bf16.msra.mxu0 0
        %1380 = vmatprep.mubr.bf16.mxu0 0
        %1381 = vmatmul.mubr.bf16.gmra.mrb[0].mxu0 %v1283
        %v1382 = vpop.f32.mrb[0].mxu0
        %v1383 = vadd.f32 0.0, %v1382
        %v1384 = vpop.f32.mrb[0].mxu0
        %v1385 = vpop.f32.mrb[0].mxu0
        %v1386 = vadd.f32 0.0, %v1385
        %v1387 = vpop.f32.mrb[0].mxu0
        %1388 = vdwg.mxu0
        %v1389 = vadd.f32 %v1281, %v1383
        %v1390 = vadd.f32 %v1282, %v1386
        %vm1391 = vcmask 261120
        %1392 = vst.msk [vmem:[#allocation4] sm:$0xff] %vm1391, %v1389
        %1393 = vst.msk [vmem:[#allocation4 + $0x8] sm:$0xff] %vm1391, %v1390
        %1394 = vst.msk [vmem:[#allocation2] sm:$0xff] %vm1266, %v1232
        %1395 = vst.msk [vmem:[#allocation2 + $0x8] sm:$0xff] %vm1266, %v1233
        %p1396 = scmp.eq.s32.totalorder %s28, 1
        // Predicated region
        $region79: #{bilinear_attention.1} parent=69 // pred_check
          %p1397 = pneg %p1396
        $region80: #{bilinear_attention.1} parent=69 // pred_check_branch
          %1399 = sbr.rel (%p1397) target = $region82
        $region81: #{bilinear_attention.1} parent=69 // pred_region
          %v1400 = vld [vmem:[#allocation3] sm:$0xff]
          %v1401 = vld [vmem:[#allocation3 + $0x8] sm:$0xff]
          %v1402 = vrcp.pop %v1400
          %v1403 = vrcp.pop %v1401
          %v1404 = vld [vmem:[#allocation4] sm:$0xff]
          %v1405 = vld [vmem:[#allocation4 + $0x8] sm:$0xff]
          %1407 = vset.pattern.permute.xlu0 0
          %1408 = vperm.xlu0 %1407, %v1402
          %v1409 = vpop.permute.xlu0 %1408
          %1412 = vset.pattern.permute.xlu0 0
          %1413 = vperm.xlu0 %1412, %v1403
          %v1414 = vpop.permute.xlu0 %1413
          %v1416 = vmul.f32 %v1404, %v1409
          %v1417 = vmul.f32 %v1405, %v1414
          %1418 = vst.msk [vmem:[%s379] sm:$0xff] %vm1391, %v1416
          %1419 = vst.msk [vmem:[%s379 + $0x8] sm:$0xff] %vm1391, %v1417
          %v1420 = vld [vmem:[#allocation2] sm:$0xff]
          %v1421 = vld [vmem:[#allocation2 + $0x8] sm:$0xff]
          %v1422 = vld [vmem:[#allocation3] sm:$0xff]
          %v1423 = vld [vmem:[#allocation3 + $0x8] sm:$0xff]
          %v1424 = vlog2.pop %v1422
          %v1425 = vmul.f32 %v1424, 0.6931472
          %v1426 = vlog2.pop %v1423
          %v1427 = vmul.f32 %v1426, 0.6931472
          %v1428 = vadd.f32 %v1420, %v1425
          %v1429 = vadd.f32 %v1421, %v1427
          %1430 = vst.msk [vmem:[%s427] sm:$0xff] %vm1266, %v1428
          %1431 = vst.msk [vmem:[%s427 + $0x8] sm:$0xff] %vm1266, %v1429
        $region82: #{bilinear_attention.1} parent=69 // pred_fallthru
          _
        %s1432 = sand.u32 %s155, 1
        %s1433 = scalar_lea.sflag [#allocation7], %s1432
        %s1434 = sand.u32 %s155, 1
        %s1435 = smul.addr %s1434, 16
        %s1436 = scalar_lea.vmem [#allocation6], %s1435
        %s1437 = sand.u32 %s185, 1
        %s1438 = sand.u32 %s185, 1
        %s1439 = smul.addr %s1438, 16
        %s1440 = scalar_lea.vmem [#allocation8], %s1439
        %s1441 = smul.u32 2, %s27
        %p1442 = scmp.lt.s32.totalorder %s26, 1
        %s1443 = scalar_select %p1442, %s26, 1
        %p1444 = scmp.lt.s32.totalorder %s1441, 1
        %s1445 = scalar_select %p1444, %s1441, 1
        %s1446 = smul.addr %s1443, 2
        %s1447 = sadd.s32 %s1445, %s1446
        %s1448 = smul.addr %s1447, 8
        %s1449 = scalar_lea.vmem %s6, %s1448
        // Predicated region
        $region83: #{bilinear_attention.1} parent=69 // pred_check
          %p1450 = pneg %p165
        $region84: #{bilinear_attention.1} parent=69 // pred_check_branch
          %1452 = sbr.rel (%p1450) target = $region86
        $region85: #{bilinear_attention.1} parent=69 // pred_region
          %s1453 = smul.u32 2, %s27
          %s1455 = ssub.s32 256, 256
          %1456 = vsyncadd %s1433, %s1455
          %s1457 = smul.addr %s26, 2
          %s1458 = sadd.s32 %s1453, %s1457
          %s1459 = smul.addr %s1458, 128
          %s1460 = scalar_lea.hbm %s4, %s1459
          %s1461 = sshll.u32 %s1436, 4
          %s1462 = int_to_ptr.vmem [resolvable:$true] %s1461
          %1467 = dma.vmem_to_hbm [thread:$0]  %s1462, 256, %s1460, %s1433, 128, 128, 8
        $region86: #{bilinear_attention.1} parent=69 // pred_fallthru
          _
        // Predicated region
        $region87: #{bilinear_attention.1} parent=69 // pred_check
          %p1468 = pneg %p195
        $region88: #{bilinear_attention.1} parent=69 // pred_check_branch
          %1470 = sbr.rel (%p1468) target = $region90
        $region89: #{bilinear_attention.1} parent=69 // pred_region
          %s1471 = smul.u32 2, %s27
          %s1472 = smul.addr %s1471, 2
          %s1473 = sadd.s32 %s28, %s1472
          %s1474 = smul.addr %s26, 4
          %s1475 = sadd.s32 %s1473, %s1474
          %s1476 = smul.addr %s1475, 8
          %s1477 = scalar_lea.vmem %s5, %s1476
          // Predicated region
          $region91: #{bilinear_attention.1} parent=89 // pred_check
            _
          $region92: #{bilinear_attention.1} parent=89 // pred_check_branch
            %1479 = sbr.rel (0) target = $region94
          $region93: #{bilinear_attention.1} parent=89 // pred_region
            // Predicated region
            $region95: #{bilinear_attention.1} parent=93 // pred_check
              _
            $region96: #{bilinear_attention.1} parent=93 // pred_check_branch
              %1481 = sbr.rel (0) target = $region98
            $region97: #{bilinear_attention.1} parent=93 // pred_region
              // Predicated region
              $region110: #{bilinear_attention.1} parent=97 // pred_check
                _
              $region111: #{bilinear_attention.1} parent=97 // pred_check_branch
                %1498 = sbr.rel (0) target = $region113
              $region112: #{bilinear_attention.1} parent=97 // pred_region
                loop: start=0, step=1, limit=1
                $region114: #{bilinear_attention.1} parent=112 // loop_pre_header
                  _
                $region115: #{bilinear_attention.1} parent=112 // loop_header
                  %s1500 = sphi 0, %s1504
                  %p1501 = scmp.ge.s32.totalorder %s1500, 1
                  %s1505 = sphi %s1440, %s1440
                  %s1506 = sphi %s1477, %s1477
                $region116: #{bilinear_attention.1} parent=112 // loop_header_branch
                  %1503 = sbr.rel (%p1501) target = $region120
                $region117: #{bilinear_attention.1} parent=112 // loop_body
                  %v1507 = vld [vmem:[%s1505] sm:$0xff]
                  %1508 = vst [vmem:[%s1506] sm:$0xff] %v1507
                  %v1509 = vld [vmem:[%s1505 + $0x8] sm:$0xff]
                  %1510 = vst [vmem:[%s1506 + $0x10] sm:$0xff] %v1509
                $region118: #{bilinear_attention.1} parent=112 // loop_footer
                  %s1504 = sadd.s32 1, %s1500
                $region119: #{bilinear_attention.1} parent=112 // loop_footer_branch
                  %1499 = sbr.rel target = $region115
                $region120: #{bilinear_attention.1} parent=112 // loop_exit
                  _
              $region113: #{bilinear_attention.1} parent=97 // pred_fallthru
                _
              // Predicated region
              $region121: #{bilinear_attention.1} parent=97 // pred_check
                _
              $region122: #{bilinear_attention.1} parent=97 // pred_check_branch
                %1512 = sbr.rel target = $region124
              $region123: #{bilinear_attention.1} parent=97 // pred_region
                _
              $region124: #{bilinear_attention.1} parent=97 // pred_fallthru
                _
            $region98: #{bilinear_attention.1} parent=93 // pred_fallthru
              _
            // Predicated region
            $region99: #{bilinear_attention.1} parent=93 // pred_check
              _
            $region100: #{bilinear_attention.1} parent=93 // pred_check_branch
              %1483 = sbr.rel target = $region102
            $region101: #{bilinear_attention.1} parent=93 // pred_region
              loop: start=0, step=1, limit=1
              $region103: #{bilinear_attention.1} parent=101 // loop_pre_header
                _
              $region104: #{bilinear_attention.1} parent=101 // loop_header
                %s1486 = sphi 0, %s1490
                %p1487 = scmp.ge.s32.totalorder %s1486, 1
                %s1491 = sphi %s1440, %s1440
                %s1492 = sphi %s1477, %s1477
              $region105: #{bilinear_attention.1} parent=101 // loop_header_branch
                %1489 = sbr.rel (%p1487) target = $region109
              $region106: #{bilinear_attention.1} parent=101 // loop_body
                %v1493 = vld [vmem:[%s1491] sm:$0xff]
                %1494 = vst [vmem:[%s1492] sm:$0xff] %v1493
                %v1495 = vld [vmem:[%s1491 + $0x8] sm:$0xff]
                %1496 = vst [vmem:[%s1492 + $0x10] sm:$0xff] %v1495
              $region107: #{bilinear_attention.1} parent=101 // loop_footer
                %s1490 = sadd.s32 1, %s1486
              $region108: #{bilinear_attention.1} parent=101 // loop_footer_branch
                %1485 = sbr.rel target = $region104
              $region109: #{bilinear_attention.1} parent=101 // loop_exit
                _
            $region102: #{bilinear_attention.1} parent=93 // pred_fallthru
              _
          $region94: #{bilinear_attention.1} parent=89 // pred_fallthru
            _
          %1513 = vnop
        $region90: #{bilinear_attention.1} parent=69 // pred_fallthru
          _
        // Predicated region
        $region125: #{bilinear_attention.1} parent=69 // pred_check
          %p1514 = pneg %p223
        $region126: #{bilinear_attention.1} parent=69 // pred_check_branch
          %1516 = sbr.rel (%p1514) target = $region128
        $region127: #{bilinear_attention.1} parent=69 // pred_region
          %s1517 = smul.u32 2, %s27
        $region128: #{bilinear_attention.1} parent=69 // pred_fallthru
          _
      $region70: #{bilinear_attention.1} parent=5 // pred_fallthru
        _
      %p1518 = scmp.le.s32.totalorder 2, %s16
      // Predicated region
      $region129: #{bilinear_attention.1} parent=5 // pred_check
        %p1519 = pneg %p1518
      $region130: #{bilinear_attention.1} parent=5 // pred_check_branch
        %1521 = sbr.rel (%p1519) target = $region132
      $region131: #{bilinear_attention.1} parent=5 // pred_region
        %s1522 = ssub.s32 %s16, 2
        // Predicated region
        $region133: #{bilinear_attention.1} parent=131 // pred_check
          %p1523 = pneg %p171
        $region134: #{bilinear_attention.1} parent=131 // pred_check_branch
          %1525 = sbr.rel (%p1523) target = $region136
        $region135: #{bilinear_attention.1} parent=131 // pred_region
          %s1526 = sand.u32 %s156, 1
          %s1527 = scalar_lea.sflag [#allocation7], %s1526
          %s1528 = sand.u32 %s156, 1
          %s1529 = smul.addr %s1528, 16
          %s1530 = scalar_lea.vmem [#allocation6], %s1529
          %1531 = dma.done %s1527, 256
        $region136: #{bilinear_attention.1} parent=131 // pred_fallthru
          _
        // Predicated region
        $region137: #{bilinear_attention.1} parent=131 // pred_check
          %p1532 = pneg %p201
        $region138: #{bilinear_attention.1} parent=131 // pred_check_branch
          %1534 = sbr.rel (%p1532) target = $region140
        $region139: #{bilinear_attention.1} parent=131 // pred_region
          %s1535 = sand.u32 %s186, 1
          %s1536 = sand.u32 %s186, 1
          %s1537 = smul.addr %s1536, 16
          %s1538 = scalar_lea.vmem [#allocation8], %s1537
        $region140: #{bilinear_attention.1} parent=131 // pred_fallthru
          _
        // Predicated region
        $region141: #{bilinear_attention.1} parent=131 // pred_check
          %p1539 = pneg %p229
        $region142: #{bilinear_attention.1} parent=131 // pred_check_branch
          %1541 = sbr.rel (%p1539) target = $region144
        $region143: #{bilinear_attention.1} parent=131 // pred_region
          %s1542 = smul.u32 2, %s30
          %p1543 = scmp.lt.s32.totalorder %s29, 1
          %s1544 = scalar_select %p1543, %s29, 1
          %p1545 = scmp.lt.s32.totalorder %s1542, 1
          %s1546 = scalar_select %p1545, %s1542, 1
          %s1547 = smul.addr %s1544, 2
          %s1548 = sadd.s32 %s1546, %s1547
          %s1549 = smul.addr %s1548, 8
          %s1550 = scalar_lea.vmem %s6, %s1549
        $region144: #{bilinear_attention.1} parent=131 // pred_fallthru
          _
      $region132: #{bilinear_attention.1} parent=5 // pred_fallthru
        _
    $region6: #{bilinear_attention.1} parent=1 // loop_footer
      %s20 = sadd.s32 1, %s16
    $region7: #{bilinear_attention.1} parent=1 // loop_footer_branch
      %15 = sbr.rel target = $region3
    $region8: #{bilinear_attention.1} parent=1 // loop_exit
      _
    %1551 = vsyncpa [#allocation7], 1
    %s1552 = scalar_lea.sflag [#allocation7], 1
    %1553 = vsyncpa %s1552, 1

</llo_original>
